<compile_context>
chip_gen: v7x
topology: tpu7x:2x2x1
jax: 0.10.0
libtpu: 0.0.40
codegen_flags: <defaults>
</compile_context>

<pallas_src>
from functools import partial

import numpy as np
import jax
import jax.numpy as jnp
from jax.experimental import pallas as pl
from jax.experimental.pallas import tpu as pltpu

N_LEADS = 12


# ----------------------------- graph constants ----------------------------- #
def _create_ecg_adjacency():
    """Same graph as ECGGraphNetwork._create_ecg_adjacency (incl. self-loops)."""
    adj = np.zeros((N_LEADS, N_LEADS), dtype=np.float64)
    limb = [(0, 1), (0, 2), (1, 2), (0, 3), (1, 3),
            (2, 3), (0, 4), (1, 4), (1, 5), (2, 5)]
    prec = [(6, 7), (7, 8), (8, 9), (9, 10), (10, 11)]
    for i, j in limb + prec:
        adj[i, j] = 1.0
        adj[j, i] = 1.0
    adj += np.eye(N_LEADS)
    return adj


def _normalize_adj(adj):
    """Symmetric GCN normalization D^{-1/2} A D^{-1/2} (A already has self-loops)."""
    deg = adj.sum(axis=1)
    d = 1.0 / np.sqrt(deg)
    return (adj * d[:, None]) * d[None, :]


def _round_up(x, m):
    return ((x + m - 1) // m) * m


# ----------------------------- Pallas kernel ------------------------------- #
def _gcn_fused_kernel(x_ref, k1_ref, k2_ref, k3e_ref,
                      b1_ref, b2_ref, b3_ref, out_ref, *, mm_dtype):
    """One grid step = Bt batch elements, batch-flattened (Bt, 12*F) layout.

    K_l = kron(A_norm^T, W_l) fuses node mixing + weight matmul:
      (x_flat @ K_l)[b, i*O + o] = sum_j A[i,j] * (x[b,j,:] @ W_l)[o]
    k3e = [ kron(A^T, W3) | kron(colmean(A), W3) | 0-pad ]  (conv3 + mean pool in one pass)
    """
    o_dim = b3_ref.shape[-1]
    n3 = N_LEADS * o_dim
    bt = x_ref.shape[0]
    out_w = out_ref.shape[-1]

    # x is read as f32 from HBM; cast to matmul dtype in-kernel (cheap VPU work).
    x = x_ref[...].astype(mm_dtype)                                   # (Bt, 12*F_in)

    # conv1 + ReLU (dropout = identity at inference)
    h = jnp.dot(x, k1_ref[...], preferred_element_type=jnp.float32) + b1_ref[...]
    h = jnp.maximum(h, 0.0).astype(mm_dtype)                          # (Bt, 12*H)

    # conv2 + ReLU
    h = jnp.dot(h, k2_ref[...], preferred_element_type=jnp.float32) + b2_ref[...]
    h2 = jnp.maximum(h, 0.0).astype(mm_dtype)                         # (Bt, 12*H)

    # conv3 (per-lead) + fused mean pooling in a single MXU pass (no bias yet)
    h3 = jnp.dot(h2, k3e_ref[...], preferred_element_type=jnp.float32)  # (Bt, Npad)

    # mean branch: columns [n3, n3+o) already hold mean_i conv3(h2); add b3 once
    x_mean = h3[:, n3:n3 + o_dim] + b3_ref[...]                       # (Bt, O)

    # max branch: max over the 12 lead blocks of the raw conv3 output, then + b3
    # (exact: max_i(h + const) == max_i(h) + const since b3 is identical per block)
    raw = h3[:, :n3]
    groups_per_vreg = 128 // o_dim if o_dim <= 128 and 128 % o_dim == 0 else 0
    if (groups_per_vreg > 0 and n3 % 128 == 0
            and N_LEADS % groups_per_vreg == 0):
        # aligned 128-lane VPU maxima over the vreg slices ...
        m = raw[:, 0:128]
        for i in range(1, n3 // 128):
            m = jnp.maximum(m, raw[:, i * 128:(i + 1) * 128])
        # ... then collapse the o_dim-wide groups inside the vreg via XLU rolls
        s = 64
        while s >= o_dim:
            m = jnp.maximum(m, pltpu.roll(m, shift=s, axis=1))
            s //= 2
        x_max = m[:, :o_dim]
    else:
        # generic fallback: straight slice maxima
        x_max = raw[:, 0:o_dim]
        for i in range(1, N_LEADS):
            x_max = jnp.maximum(x_max, raw[:, i * o_dim:(i + 1) * o_dim])
    x_max = x_max + b3_ref[...]

    # lane-dense single-shot store: [mean | max | zeros] -> (Bt, out_w), out_w % 128 == 0
    pad_w = out_w - 2 * o_dim
    pieces = [x_mean, x_max]
    if pad_w > 0:
        pieces.append(jnp.zeros((bt, pad_w), jnp.float32))
    out_ref[...] = jnp.concatenate(pieces, axis=-1)


# --------------------------------- wrapper ---------------------------------- #
def ecg_graph_network(x, params, adj_norm, *, b_tile=1024, mm_dtype=jnp.bfloat16):
    """x: (B, 12, F_in) f32 -> (B, 2*output_dim) f32."""
    B, n, f_in = x.shape
    assert n == N_LEADS
    w1, b1, w2, b2, w3, b3 = params
    hid = w1.shape[1]
    out_dim = w3.shape[1]

    # ---- host-side precompute of fused (adjacency ⊗ weight) matrices ----
    A = np.asarray(adj_norm, np.float64)
    W1 = np.asarray(w1, np.float64)
    W2 = np.asarray(w2, np.float64)
    W3 = np.asarray(w3, np.float64)

    # K_l[j*F+f, i*O+o] = A[i, j] * W_l[f, o]
    K1 = jnp.asarray(np.kron(A.T, W1), mm_dtype)          # (12*f_in, 12*hid)
    K2 = jnp.asarray(np.kron(A.T, W2), mm_dtype)          # (12*hid,  12*hid)

    K3 = np.kron(A.T, W3)                                 # (12*hid, 12*out)
    c = A.mean(axis=0)                                    # c[j] = mean_i A[i, j]
    Km = np.kron(c[:, None], W3)                          # (12*hid, out)  mean-pool fused
    K3e = np.concatenate([K3, Km], axis=1)                # (12*hid, 12*out + out)
    n3e_pad = _round_up(K3e.shape[1], 128)
    if n3e_pad != K3e.shape[1]:
        K3e = np.pad(K3e, ((0, 0), (0, n3e_pad - K3e.shape[1])))
    K3e = jnp.asarray(K3e, mm_dtype)                      # (12*hid, n3e_pad)

    b1_t = jnp.asarray(np.tile(np.asarray(b1, np.float32), (1, N_LEADS)))  # (1, 12*hid)
    b2_t = jnp.asarray(np.tile(np.asarray(b2, np.float32), (1, N_LEADS)))  # (1, 12*hid)
    b3_f = jnp.asarray(np.asarray(b3, np.float32))                         # (1, out)

    # ---- batch tiling ----
    # cap bt so there are >=2 grid steps whenever B allows it (keeps both v7x TCs busy);
    # bt multiple of 16 (bf16 sublane packing for in-kernel activations).
    cap = _round_up(max((B + 1) // 2, 16), 16)
    bt = max(16, min(_round_up(int(b_tile), 16), cap))
    Bp = _round_up(B, bt)
    n_tiles = Bp // bt

    # x stays f32 in HBM; the cast to mm_dtype happens inside the kernel.
    x_flat = x.reshape(B, n * f_in).astype(jnp.float32)   # row-major: [b, j*F+f] = x[b,j,f]
    if Bp != B:
        x_flat = jnp.pad(x_flat, ((0, Bp - B), (0, 0)))   # zero rows, sliced off below

    out_w = _round_up(2 * out_dim, 128)                   # lane-dense output slab width

    kernel = partial(_gcn_fused_kernel, mm_dtype=mm_dtype)

    out = pl.pallas_call(
        kernel,
        out_shape=jax.ShapeDtypeStruct((Bp, out_w), jnp.float32),
        grid_spec=pltpu.PrefetchScalarGridSpec(
            num_scalar_prefetch=0,
            grid=(n_tiles,),
            in_specs=[
                pl.BlockSpec((bt, n * f_in), lambda t: (t, 0)),   # x tile (f32)
                pl.BlockSpec(K1.shape, lambda t: (0, 0)),         # fused conv1
                pl.BlockSpec(K2.shape, lambda t: (0, 0)),         # fused conv2
                pl.BlockSpec(K3e.shape, lambda t: (0, 0)),        # fused conv3 [+ mean pool]
                pl.BlockSpec(b1_t.shape, lambda t: (0, 0)),
                pl.BlockSpec(b2_t.shape, lambda t: (0, 0)),
                pl.BlockSpec(b3_f.shape, lambda t: (0, 0)),
            ],
            out_specs=pl.BlockSpec((bt, out_w), lambda t: (t, 0)),
        ),
        compiler_params=pltpu.CompilerParams(
            dimension_semantics=("parallel",),          # shards grid across v7x's 2 TCs
            vmem_limit_bytes=32 * 1024 * 1024),         # fits v7x's 64 MiB physical VMEM
    )(x_flat, K1, K2, K3e, b1_t, b2_t, b3_f)

    return out[:B, :2 * out_dim]


# --------------------------- pure-JAX reference ----------------------------- #
def ecg_graph_network_ref(x, params, adj_norm):
    w1, b1, w2, b2, w3, b3 = params
    a = adj_norm
    h = jnp.einsum('ij,bjf->bif', a, x @ w1) + b1
    h = jnp.maximum(h, 0.0)
    h = jnp.einsum('ij,bjf->bif', a, h @ w2) + b2
    h = jnp.maximum(h, 0.0)
    h = jnp.einsum('ij,bjf->bif', a, h @ w3) + b3
    return jnp.concatenate([h.mean(axis=1), h.max(axis=1)], axis=-1)


# --------------------------------- main ------------------------------------ #
if __name__ == "__main__":
    B = 32                                   # small demo batch -> 2 grid steps of 16
    input_dim, hidden_dim, output_dim = 64, 32, 32

    key = jax.random.PRNGKey(0)
    kx, k1, k2, k3, kb1, kb2, kb3 = jax.random.split(key, 7)

    def glorot(k, fan_in, fan_out):
        scale = np.sqrt(2.0 / (fan_in + fan_out)).astype(np.float32)
        return jax.random.normal(k, (fan_in, fan_out), jnp.float32) * scale

    # deterministic synthetic parameters (GCNConv weight/bias shapes)
    w1 = glorot(k1, input_dim, hidden_dim)
    w2 = glorot(k2, hidden_dim, hidden_dim)
    w3 = glorot(k3, hidden_dim, output_dim)
    b1 = 0.1 * jax.random.normal(kb1, (1, hidden_dim), jnp.float32)
    b2 = 0.1 * jax.random.normal(kb2, (1, hidden_dim), jnp.float32)
    b3 = 0.1 * jax.random.normal(kb3, (1, output_dim), jnp.float32)
    params = (w1, b1, w2, b2, w3, b3)

    adj_norm = jnp.asarray(_normalize_adj(_create_ecg_adjacency()), jnp.float32)
    x = jax.random.normal(kx, (B, N_LEADS, input_dim), jnp.float32)

    ref = ecg_graph_network_ref(x, params, adj_norm)

    # 1) exact-semantics check: f32 matmul operands, tight tolerance
    out_f32 = jax.block_until_ready(
        ecg_graph_network(x, params, adj_norm, mm_dtype=jnp.float32))
    np.testing.assert_allclose(np.asarray(out_f32), np.asarray(ref),
                               rtol=1e-4, atol=1e-4)

    # 2) performance configuration: bf16 matmul operands, f32 accumulate/elementwise
    #    (bf16 rounding of the kron(A,W) operands -> loose tolerance vs. f32 reference)
    out_bf16 = jax.block_until_ready(
        ecg_graph_network(x, params, adj_norm, mm_dtype=jnp.bfloat16))
    np.testing.assert_allclose(np.asarray(out_bf16), np.asarray(ref),
                               rtol=5e-2, atol=5e-2)

    assert out_bf16.shape == (B, 2 * output_dim)
    print("KERNEL_OK")
</pallas_src>

<mosaic_0001>
module attributes {stable_mosaic.version = 11 : i64} {
  func.func @_gcn_fused_kernel(%arg0: i32, %arg1: memref<16x768xf32, #tpu.memory_space<vmem>>, %arg2: memref<768x384xf32, #tpu.memory_space<vmem>>, %arg3: memref<384x384xf32, #tpu.memory_space<vmem>>, %arg4: memref<384x512xf32, #tpu.memory_space<vmem>>, %arg5: memref<1x384xf32, #tpu.memory_space<vmem>>, %arg6: memref<1x384xf32, #tpu.memory_space<vmem>>, %arg7: memref<1x32xf32, #tpu.memory_space<vmem>>, %arg8: memref<16x128xf32, #tpu.memory_space<vmem>>) attributes {dimension_semantics = [#tpu.dimension_semantics<parallel>], iteration_bounds = array<i64: 2>, scalar_prefetch = 0 : i64, scratch_operands = 0 : i64, tpu.core_type = #tpu.core_type<tc>, window_params = [{transform_indices = @transform_0, window_bounds = array<i64: 16, 768>}, {pipeline_mode = #tpu.pipeline_mode<synchronous>, transform_indices = @transform_1, window_bounds = array<i64: 768, 384>}, {pipeline_mode = #tpu.pipeline_mode<synchronous>, transform_indices = @transform_2, window_bounds = array<i64: 384, 384>}, {pipeline_mode = #tpu.pipeline_mode<synchronous>, transform_indices = @transform_3, window_bounds = array<i64: 384, 512>}, {pipeline_mode = #tpu.pipeline_mode<synchronous>, transform_indices = @transform_4, window_bounds = array<i64: 1, 384>}, {pipeline_mode = #tpu.pipeline_mode<synchronous>, transform_indices = @transform_5, window_bounds = array<i64: 1, 384>}, {pipeline_mode = #tpu.pipeline_mode<synchronous>, transform_indices = @transform_6, window_bounds = array<i64: 1, 32>}, {transform_indices = @transform_7, window_bounds = array<i64: 16, 128>}]} {
    %c0 = arith.constant 0 : index
    %c0_0 = arith.constant 0 : index
    %0 = vector.load %arg1[%c0, %c0_0] : memref<16x768xf32, #tpu.memory_space<vmem>>, vector<16x768xf32>
    %c0_1 = arith.constant 0 : index
    %c0_2 = arith.constant 0 : index
    %1 = vector.load %arg2[%c0_1, %c0_2] : memref<768x384xf32, #tpu.memory_space<vmem>>, vector<768x384xf32>
    %cst = arith.constant dense<0.000000e+00> : vector<16x384xf32>
    %2 = tpu.matmul %0, %1, %cst {dimension_numbers = #tpu.dot_dimension_numbers<[1], [0], [0], [1], [0, 0, 1, 1], [], []>} : vector<16x768xf32>, vector<768x384xf32>, vector<16x384xf32> -> vector<16x384xf32>
    %c0_3 = arith.constant 0 : index
    %c0_4 = arith.constant 0 : index
    %3 = vector.load %arg5[%c0_3, %c0_4] : memref<1x384xf32, #tpu.memory_space<vmem>>, vector<1x384xf32>
    %4 = vector.broadcast %3 : vector<1x384xf32> to vector<16x384xf32>
    %5 = arith.addf %2, %4 : vector<16x384xf32>
    %cst_5 = arith.constant 0.000000e+00 : f32
    %6 = vector.broadcast %cst_5 : f32 to vector<16x384xf32>
    %7 = arith.maximumf %5, %6 : vector<16x384xf32>
    %c0_6 = arith.constant 0 : index
    %c0_7 = arith.constant 0 : index
    %8 = vector.load %arg3[%c0_6, %c0_7] : memref<384x384xf32, #tpu.memory_space<vmem>>, vector<384x384xf32>
    %cst_8 = arith.constant dense<0.000000e+00> : vector<16x384xf32>
    %9 = tpu.matmul %7, %8, %cst_8 {dimension_numbers = #tpu.dot_dimension_numbers<[1], [0], [0], [1], [0, 0, 1, 1], [], []>} : vector<16x384xf32>, vector<384x384xf32>, vector<16x384xf32> -> vector<16x384xf32>
    %c0_9 = arith.constant 0 : index
    %c0_10 = arith.constant 0 : index
    %10 = vector.load %arg6[%c0_9, %c0_10] : memref<1x384xf32, #tpu.memory_space<vmem>>, vector<1x384xf32>
    %11 = vector.broadcast %10 : vector<1x384xf32> to vector<16x384xf32>
    %12 = arith.addf %9, %11 : vector<16x384xf32>
    %cst_11 = arith.constant 0.000000e+00 : f32
    %13 = vector.broadcast %cst_11 : f32 to vector<16x384xf32>
    %14 = arith.maximumf %12, %13 : vector<16x384xf32>
    %c0_12 = arith.constant 0 : index
    %c0_13 = arith.constant 0 : index
    %15 = vector.load %arg4[%c0_12, %c0_13] : memref<384x512xf32, #tpu.memory_space<vmem>>, vector<384x512xf32>
    %cst_14 = arith.constant dense<0.000000e+00> : vector<16x512xf32>
    %16 = tpu.matmul %14, %15, %cst_14 {dimension_numbers = #tpu.dot_dimension_numbers<[1], [0], [0], [1], [0, 0, 1, 1], [], []>} : vector<16x384xf32>, vector<384x512xf32>, vector<16x512xf32> -> vector<16x512xf32>
    %17 = vector.extract_strided_slice %16 {offsets = [0, 384], sizes = [16, 32], strides = [1, 1]} : vector<16x512xf32> to vector<16x32xf32>
    %c0_15 = arith.constant 0 : index
    %c0_16 = arith.constant 0 : index
    %18 = vector.load %arg7[%c0_15, %c0_16] : memref<1x32xf32, #tpu.memory_space<vmem>>, vector<1x32xf32>
    %19 = vector.broadcast %18 : vector<1x32xf32> to vector<16x32xf32>
    %20 = arith.addf %17, %19 : vector<16x32xf32>
    %21 = vector.extract_strided_slice %16 {offsets = [0, 0], sizes = [16, 384], strides = [1, 1]} : vector<16x512xf32> to vector<16x384xf32>
    %22 = vector.extract_strided_slice %21 {offsets = [0, 0], sizes = [16, 128], strides = [1, 1]} : vector<16x384xf32> to vector<16x128xf32>
    %23 = vector.extract_strided_slice %21 {offsets = [0, 128], sizes = [16, 128], strides = [1, 1]} : vector<16x384xf32> to vector<16x128xf32>
    %24 = arith.maximumf %22, %23 : vector<16x128xf32>
    %25 = vector.extract_strided_slice %21 {offsets = [0, 256], sizes = [16, 128], strides = [1, 1]} : vector<16x384xf32> to vector<16x128xf32>
    %26 = arith.maximumf %24, %25 : vector<16x128xf32>
    %c64_i32 = arith.constant 64 : i32
    %27 = tpu.dynamic_rotate %26 by %c64_i32 dim 1 : vector<16x128xf32>, i32 -> vector<16x128xf32>
    %28 = arith.maximumf %26, %27 : vector<16x128xf32>
    %c32_i32 = arith.constant 32 : i32
    %29 = tpu.dynamic_rotate %28 by %c32_i32 dim 1 : vector<16x128xf32>, i32 -> vector<16x128xf32>
    %30 = arith.maximumf %28, %29 : vector<16x128xf32>
    %31 = vector.extract_strided_slice %30 {offsets = [0, 0], sizes = [16, 32], strides = [1, 1]} : vector<16x128xf32> to vector<16x32xf32>
    %c0_17 = arith.constant 0 : index
    %c0_18 = arith.constant 0 : index
    %32 = vector.load %arg7[%c0_17, %c0_18] : memref<1x32xf32, #tpu.memory_space<vmem>>, vector<1x32xf32>
    %33 = vector.broadcast %32 : vector<1x32xf32> to vector<16x32xf32>
    %34 = arith.addf %31, %33 : vector<16x32xf32>
    %cst_19 = arith.constant 0.000000e+00 : f32
    %35 = vector.broadcast %cst_19 : f32 to vector<16x64xf32>
    %36 = tpu.concatenate %20, %34, %35 in 1 : vector<16x32xf32>, vector<16x32xf32>, vector<16x64xf32> -> vector<16x128xf32>
    %c0_20 = arith.constant 0 : index
    %c0_21 = arith.constant 0 : index
    %37 = vector.load %arg8[%c0_20, %c0_21] : memref<16x128xf32, #tpu.memory_space<vmem>>, vector<16x128xf32>
    tpu.vector_store %arg8[%c0_20, %c0_21], %36 {strides = array<i32>} : memref<16x128xf32, #tpu.memory_space<vmem>>, vector<16x128xf32>,
    return
  }
  func.func @transform_0(%arg0: i32) -> (i32, i32) {
    %c0_i32 = arith.constant 0 : i32
    %c0_i32_0 = arith.constant 0 : i32
    return %arg0, %c0_i32 : i32, i32
  }
  func.func @transform_1(%arg0: i32) -> (i32, i32) {
    %c0_i32 = arith.constant 0 : i32
    %c0_i32_0 = arith.constant 0 : i32
    %c0_i32_1 = arith.constant 0 : i32
    return %c0_i32, %c0_i32_0 : i32, i32
  }
  func.func @transform_2(%arg0: i32) -> (i32, i32) {
    %c0_i32 = arith.constant 0 : i32
    %c0_i32_0 = arith.constant 0 : i32
    %c0_i32_1 = arith.constant 0 : i32
    return %c0_i32, %c0_i32_0 : i32, i32
  }
  func.func @transform_3(%arg0: i32) -> (i32, i32) {
    %c0_i32 = arith.constant 0 : i32
    %c0_i32_0 = arith.constant 0 : i32
    %c0_i32_1 = arith.constant 0 : i32
    return %c0_i32, %c0_i32_0 : i32, i32
  }
  func.func @transform_4(%arg0: i32) -> (i32, i32) {
    %c0_i32 = arith.constant 0 : i32
    %c0_i32_0 = arith.constant 0 : i32
    %c0_i32_1 = arith.constant 0 : i32
    return %c0_i32, %c0_i32_0 : i32, i32
  }
  func.func @transform_5(%arg0: i32) -> (i32, i32) {
    %c0_i32 = arith.constant 0 : i32
    %c0_i32_0 = arith.constant 0 : i32
    %c0_i32_1 = arith.constant 0 : i32
    return %c0_i32, %c0_i32_0 : i32, i32
  }
  func.func @transform_6(%arg0: i32) -> (i32, i32) {
    %c0_i32 = arith.constant 0 : i32
    %c0_i32_0 = arith.constant 0 : i32
    %c0_i32_1 = arith.constant 0 : i32
    return %c0_i32, %c0_i32_0 : i32, i32
  }
  func.func @transform_7(%arg0: i32) -> (i32, i32) {
    %c0_i32 = arith.constant 0 : i32
    %c0_i32_0 = arith.constant 0 : i32
    return %arg0, %c0_i32 : i32, i32
  }
}

</mosaic_0001>

<llo_original>
// kernel: tpu_custom_call.1
$region0: #{tpu_custom_call.1}
  #allocation0 [shape = 'u32[]', space=smem, size = 0x4, offset = 0x4, fixed_abs, tag = 'smem constant byte address 0x4 - core index']
  #allocation1 [shape = 'u32[144,128]{1,0:T(1,128)}', space=vmem, size = 0x12000, scoped, tag = 'internal scratch']
  %s0 = inlined_call_operand.hbm [shape: f32[32,768], index: 0, kind: input, shape index: {}]
  %s1 = inlined_call_operand.hbm [shape: f32[768,384], index: 1, kind: input, shape index: {}]
  %s2 = inlined_call_operand.hbm [shape: f32[384,384], index: 2, kind: input, shape index: {}]
  %s3 = inlined_call_operand.hbm [shape: f32[384,512], index: 3, kind: input, shape index: {}]
  %s4 = inlined_call_operand.hbm [shape: f32[1,384], index: 4, kind: input, shape index: {}]
  %s5 = inlined_call_operand.hbm [shape: f32[1,384], index: 5, kind: input, shape index: {}]
  %s6 = inlined_call_operand.hbm [shape: f32[1,32], index: 6, kind: input, shape index: {}]
  %s7 = inlined_call_operand.hbm [shape: f32[32,128], index: 7, kind: output, shape index: {}]
  %s8 = sld [smem:[#allocation0]]
  $region89: #{tpu_custom_call.1} parent=0
    _
  %s10 = ssub.s32 1, %s8
  %s11 = scalar_select 0, %s10, %s8
  $region1: #{tpu_custom_call.1} parent=0
    #allocation2 [shape = 'u8[98304]{0}', space=vmem, size = 0x18000, scoped, tag = 'input window, operand 0']
    #allocation3 [shape = 's32[2]{0}', space=sflag, size = 0x8, scoped, tag = 'scoped memory for tpu_custom_call.1']
    #allocation4 [shape = 's32[2]{0}', space=sflag, size = 0x8, scoped, tag = 'scoped memory for tpu_custom_call.1']
    #allocation5 [shape = 'u8[1179648]{0}', space=vmem, size = 0x120000, scoped, tag = 'input window, operand 1, single buffered']
    #allocation6 [shape = 's32[1]{0}', space=sflag, size = 0x4, scoped, tag = 'scoped memory for tpu_custom_call.1']
    #allocation7 [shape = 'u8[589824]{0}', space=vmem, size = 0x90000, scoped, tag = 'input window, operand 2, single buffered']
    #allocation8 [shape = 'u8[786432]{0}', space=vmem, size = 0xc0000, scoped, tag = 'input window, operand 3, single buffered']
    #allocation9 [shape = 's32[1]{0}', space=sflag, size = 0x4, scoped, tag = 'scoped memory for tpu_custom_call.1']
    #allocation10 [shape = 'u8[1536]{0}', space=vmem, size = 0x800, scoped, tag = 'input window, operand 4, single buffered']
    #allocation11 [shape = 'u8[1536]{0}', space=vmem, size = 0x800, scoped, tag = 'input window, operand 5, single buffered']
    #allocation12 [shape = 's32[1]{0}', space=sflag, size = 0x4, scoped, tag = 'scoped memory for tpu_custom_call.1']
    #allocation13 [shape = 'u8[512]{0}', space=vmem, size = 0x400, scoped, tag = 'input window, operand 6, single buffered']
    #allocation14 [shape = 'u8[16384]{0}', space=vmem, size = 0x4000, scoped, tag = 'output window, operand 0']
    %12 = vsyncpa [#allocation3], 0
    %s13 = scalar_lea.sflag [#allocation3], 1
    %14 = vsyncpa %s13, 0
    %15 = vsyncpa [#allocation6], 0
    %16 = vsyncpa [#allocation9], 0
    %17 = vsyncpa [#allocation12], 0
    %18 = vsyncpa [#allocation4], 0
    %s19 = scalar_lea.sflag [#allocation4], 1
    %20 = vsyncpa %s19, 0
    loop: start=0, step=1, limit=4
    $region2: #{tpu_custom_call.1} parent=1 // loop_pre_header
      _
    $region3: #{tpu_custom_call.1} parent=1 // loop_header
      %s22 = sphi 0, %s26
      %p23 = scmp.ge.s32.totalorder %s22, 4
      %s32 = sphi 0, %s34
      %s35 = sphi 0, %s32
      %s36 = sphi 0, %s35
      %s52 = sphi 0, %s36
      %s56 = sphi 0, %s56
      %s58 = sphi 0, %s56
      %s59 = sphi 0, %s58
      %s73 = sphi 0, %s59
      %s77 = sphi 0, %s77
      %s79 = sphi 0, %s77
      %s80 = sphi 0, %s79
      %s94 = sphi 0, %s80
      %s98 = sphi 0, %s98
      %s100 = sphi 0, %s98
      %s101 = sphi 0, %s100
      %s115 = sphi 0, %s101
      %s119 = sphi 0, %s119
      %s121 = sphi 0, %s119
      %s122 = sphi 0, %s121
      %s136 = sphi 0, %s122
      %s140 = sphi 0, %s140
      %s142 = sphi 0, %s140
      %s143 = sphi 0, %s142
      %s157 = sphi 0, %s143
      %s161 = sphi 0, %s161
      %s163 = sphi 0, %s161
      %s164 = sphi 0, %s163
      %s178 = sphi 0, %s164
      %s184 = sphi 0, %s186
      %s187 = sphi 0, %s184
      %s188 = sphi 0, %s187
      %s204 = sphi 0, %s188
    $region4: #{tpu_custom_call.1} parent=1 // loop_header_branch
      %25 = sbr.rel (%p23) target = $region8
    $region5: #{tpu_custom_call.1} parent=1 // loop_body
      %s27 = ssub.s32 %s22, 1
      %s28 = ssub.s32 %s22, 2
      %s29 = sadd.s32 %s22, 1
      %s30 = ssub.s32 %s22, %s29
      %p31 = scmp.eq.s32.totalorder %s30, 0
      %s33 = sadd.s32 %s32, 1
      %s34 = scalar_select %p31, %s32, %s33
      %p37 = pneg %p31
      %p38 = scmp.eq.s32.totalorder %s22, 1
      %p39 = por %p37, %p38
      %p40 = scmp.ne.s32.totalorder %s32, %s35
      %p41 = scmp.eq.s32.totalorder %s22, 0
      %p42 = por %p40, %p41
      %p43 = scmp.ne.s32.totalorder %s32, %s35
      %p44 = scmp.eq.s32.totalorder %s27, 1
      %p45 = por %p43, %p44
      %p46 = scmp.ne.s32.totalorder %s35, %s36
      %p47 = scmp.eq.s32.totalorder %s27, 0
      %p48 = por %p46, %p47
      %p49 = scmp.ne.s32.totalorder %s35, %s36
      %p50 = scmp.eq.s32.totalorder %s28, 1
      %p51 = por %p49, %p50
      %p53 = scmp.ne.s32.totalorder %s36, %s52
      %p54 = scmp.eq.s32.totalorder %s28, 0
      %p55 = por %p53, %p54
      %s57 = sadd.s32 %s56, 1
      %p60 = scmp.eq.s32.totalorder %s22, 1
      %p61 = scmp.ne.s32.totalorder %s56, %s58
      %p62 = scmp.eq.s32.totalorder %s22, 0
      %p63 = por %p61, %p62
      %p64 = scmp.ne.s32.totalorder %s56, %s58
      %p65 = scmp.eq.s32.totalorder %s27, 1
      %p66 = por %p64, %p65
      %p67 = scmp.ne.s32.totalorder %s58, %s59
      %p68 = scmp.eq.s32.totalorder %s27, 0
      %p69 = por %p67, %p68
      %p70 = scmp.ne.s32.totalorder %s58, %s59
      %p71 = scmp.eq.s32.totalorder %s28, 1
      %p72 = por %p70, %p71
      %p74 = scmp.ne.s32.totalorder %s59, %s73
      %p75 = scmp.eq.s32.totalorder %s28, 0
      %p76 = por %p74, %p75
      %s78 = sadd.s32 %s77, 1
      %p81 = scmp.eq.s32.totalorder %s22, 1
      %p82 = scmp.ne.s32.totalorder %s77, %s79
      %p83 = scmp.eq.s32.totalorder %s22, 0
      %p84 = por %p82, %p83
      %p85 = scmp.ne.s32.totalorder %s77, %s79
      %p86 = scmp.eq.s32.totalorder %s27, 1
      %p87 = por %p85, %p86
      %p88 = scmp.ne.s32.totalorder %s79, %s80
      %p89 = scmp.eq.s32.totalorder %s27, 0
      %p90 = por %p88, %p89
      %p91 = scmp.ne.s32.totalorder %s79, %s80
      %p92 = scmp.eq.s32.totalorder %s28, 1
      %p93 = por %p91, %p92
      %p95 = scmp.ne.s32.totalorder %s80, %s94
      %p96 = scmp.eq.s32.totalorder %s28, 0
      %p97 = por %p95, %p96
      %s99 = sadd.s32 %s98, 1
      %p102 = scmp.eq.s32.totalorder %s22, 1
      %p103 = scmp.ne.s32.totalorder %s98, %s100
      %p104 = scmp.eq.s32.totalorder %s22, 0
      %p105 = por %p103, %p104
      %p106 = scmp.ne.s32.totalorder %s98, %s100
      %p107 = scmp.eq.s32.totalorder %s27, 1
      %p108 = por %p106, %p107
      %p109 = scmp.ne.s32.totalorder %s100, %s101
      %p110 = scmp.eq.s32.totalorder %s27, 0
      %p111 = por %p109, %p110
      %p112 = scmp.ne.s32.totalorder %s100, %s101
      %p113 = scmp.eq.s32.totalorder %s28, 1
      %p114 = por %p112, %p113
      %p116 = scmp.ne.s32.totalorder %s101, %s115
      %p117 = scmp.eq.s32.totalorder %s28, 0
      %p118 = por %p116, %p117
      %s120 = sadd.s32 %s119, 1
      %p123 = scmp.eq.s32.totalorder %s22, 1
      %p124 = scmp.ne.s32.totalorder %s119, %s121
      %p125 = scmp.eq.s32.totalorder %s22, 0
      %p126 = por %p124, %p125
      %p127 = scmp.ne.s32.totalorder %s119, %s121
      %p128 = scmp.eq.s32.totalorder %s27, 1
      %p129 = por %p127, %p128
      %p130 = scmp.ne.s32.totalorder %s121, %s122
      %p131 = scmp.eq.s32.totalorder %s27, 0
      %p132 = por %p130, %p131
      %p133 = scmp.ne.s32.totalorder %s121, %s122
      %p134 = scmp.eq.s32.totalorder %s28, 1
      %p135 = por %p133, %p134
      %p137 = scmp.ne.s32.totalorder %s122, %s136
      %p138 = scmp.eq.s32.totalorder %s28, 0
      %p139 = por %p137, %p138
      %s141 = sadd.s32 %s140, 1
      %p144 = scmp.eq.s32.totalorder %s22, 1
      %p145 = scmp.ne.s32.totalorder %s140, %s142
      %p146 = scmp.eq.s32.totalorder %s22, 0
      %p147 = por %p145, %p146
      %p148 = scmp.ne.s32.totalorder %s140, %s142
      %p149 = scmp.eq.s32.totalorder %s27, 1
      %p150 = por %p148, %p149
      %p151 = scmp.ne.s32.totalorder %s142, %s143
      %p152 = scmp.eq.s32.totalorder %s27, 0
      %p153 = por %p151, %p152
      %p154 = scmp.ne.s32.totalorder %s142, %s143
      %p155 = scmp.eq.s32.totalorder %s28, 1
      %p156 = por %p154, %p155
      %p158 = scmp.ne.s32.totalorder %s143, %s157
      %p159 = scmp.eq.s32.totalorder %s28, 0
      %p160 = por %p158, %p159
      %s162 = sadd.s32 %s161, 1
      %p165 = scmp.eq.s32.totalorder %s22, 1
      %p166 = scmp.ne.s32.totalorder %s161, %s163
      %p167 = scmp.eq.s32.totalorder %s22, 0
      %p168 = por %p166, %p167
      %p169 = scmp.ne.s32.totalorder %s161, %s163
      %p170 = scmp.eq.s32.totalorder %s27, 1
      %p171 = por %p169, %p170
      %p172 = scmp.ne.s32.totalorder %s163, %s164
      %p173 = scmp.eq.s32.totalorder %s27, 0
      %p174 = por %p172, %p173
      %p175 = scmp.ne.s32.totalorder %s163, %s164
      %p176 = scmp.eq.s32.totalorder %s28, 1
      %p177 = por %p175, %p176
      %p179 = scmp.ne.s32.totalorder %s164, %s178
      %p180 = scmp.eq.s32.totalorder %s28, 0
      %p181 = por %p179, %p180
      %s182 = ssub.s32 %s22, %s29
      %p183 = scmp.eq.s32.totalorder %s182, 0
      %s185 = sadd.s32 %s184, 1
      %s186 = scalar_select %p183, %s184, %s185
      %p189 = pneg %p183
      %p190 = scmp.eq.s32.totalorder %s22, 1
      %p191 = por %p189, %p190
      %p192 = scmp.ne.s32.totalorder %s184, %s187
      %p193 = scmp.eq.s32.totalorder %s22, 0
      %p194 = por %p192, %p193
      %p195 = scmp.ne.s32.totalorder %s184, %s187
      %p196 = scmp.eq.s32.totalorder %s27, 1
      %p197 = por %p195, %p196
      %p198 = scmp.ne.s32.totalorder %s187, %s188
      %p199 = scmp.eq.s32.totalorder %s27, 0
      %p200 = por %p198, %p199
      %p201 = scmp.ne.s32.totalorder %s187, %s188
      %p202 = scmp.eq.s32.totalorder %s28, 1
      %p203 = por %p201, %p202
      %p205 = scmp.ne.s32.totalorder %s188, %s204
      %p206 = scmp.eq.s32.totalorder %s28, 0
      %p207 = por %p205, %p206
      %p208 = scmp.le.s32.totalorder 1, %s22
      %p209 = scmp.lt.s32.totalorder %s22, 3
      %p210 = pnand %p208, %p209
      %p211 = pneg %p210
      // Predicated region
      $region9: #{tpu_custom_call.1} parent=5 // pred_check
        _
      $region10: #{tpu_custom_call.1} parent=5 // pred_check_branch
        %213 = sbr.rel (%p210) target = $region12
      $region11: #{tpu_custom_call.1} parent=5 // pred_region
        %s214 = ssub.s32 %s22, 1
        // Predicated region
        $region13: #{tpu_custom_call.1} parent=11 // pred_check
          %p215 = pneg %p69
        $region14: #{tpu_custom_call.1} parent=11 // pred_check_branch
          %217 = sbr.rel (%p215) target = $region16
        $region15: #{tpu_custom_call.1} parent=11 // pred_region
          %s219 = ssub.s32 36864, 36864
          %220 = vsyncadd [#allocation6], %s219
          %s221 = sshll.u32 [#allocation5], 4
          %s222 = int_to_ptr.vmem [resolvable:$true] %s221
          %227 = dma.hbm_to_vmem [thread:$0]  %s1, 36864, %s222, [#allocation6], 384, 384, 24
        $region16: #{tpu_custom_call.1} parent=11 // pred_fallthru
          _
        // Predicated region
        $region17: #{tpu_custom_call.1} parent=11 // pred_check
          %p228 = pneg %p90
        $region18: #{tpu_custom_call.1} parent=11 // pred_check_branch
          %230 = sbr.rel (%p228) target = $region20
        $region19: #{tpu_custom_call.1} parent=11 // pred_region
          %s232 = ssub.s32 18432, 18432
          %233 = vsyncadd [#allocation6], %s232
          %s234 = sshll.u32 [#allocation7], 4
          %s235 = int_to_ptr.vmem [resolvable:$true] %s234
          %240 = dma.hbm_to_vmem [thread:$0]  %s2, 18432, %s235, [#allocation6], 384, 384, 24
        $region20: #{tpu_custom_call.1} parent=11 // pred_fallthru
          _
        // Predicated region
        $region21: #{tpu_custom_call.1} parent=11 // pred_check
          %p241 = pneg %p111
        $region22: #{tpu_custom_call.1} parent=11 // pred_check_branch
          %243 = sbr.rel (%p241) target = $region24
        $region23: #{tpu_custom_call.1} parent=11 // pred_region
          %s245 = ssub.s32 24576, 24576
          %246 = vsyncadd [#allocation9], %s245
          %s247 = sshll.u32 [#allocation8], 4
          %s248 = int_to_ptr.vmem [resolvable:$true] %s247
          %253 = dma.hbm_to_vmem [thread:$0]  %s3, 24576, %s248, [#allocation9], 512, 512, 32
        $region24: #{tpu_custom_call.1} parent=11 // pred_fallthru
          _
        // Predicated region
        $region25: #{tpu_custom_call.1} parent=11 // pred_check
          %p254 = pneg %p132
        $region26: #{tpu_custom_call.1} parent=11 // pred_check_branch
          %256 = sbr.rel (%p254) target = $region28
        $region27: #{tpu_custom_call.1} parent=11 // pred_region
          %s258 = ssub.s32 48, 48
          %259 = vsyncadd [#allocation9], %s258
          %s261 = sshll.u32 [#allocation10], 4
          %s262 = int_to_ptr.vmem [resolvable:$true] %s261
          %264 = dma.hbm_to_vmem [thread:$0]  %s4, 48, %s262, [#allocation9]
        $region28: #{tpu_custom_call.1} parent=11 // pred_fallthru
          _
        // Predicated region
        $region29: #{tpu_custom_call.1} parent=11 // pred_check
          %p265 = pneg %p153
        $region30: #{tpu_custom_call.1} parent=11 // pred_check_branch
          %267 = sbr.rel (%p265) target = $region32
        $region31: #{tpu_custom_call.1} parent=11 // pred_region
          %s269 = ssub.s32 48, 48
          %270 = vsyncadd [#allocation12], %s269
          %s272 = sshll.u32 [#allocation11], 4
          %s273 = int_to_ptr.vmem [resolvable:$true] %s272
          %275 = dma.hbm_to_vmem [thread:$0]  %s5, 48, %s273, [#allocation12]
        $region32: #{tpu_custom_call.1} parent=11 // pred_fallthru
          _
        // Predicated region
        $region33: #{tpu_custom_call.1} parent=11 // pred_check
          %p276 = pneg %p174
        $region34: #{tpu_custom_call.1} parent=11 // pred_check_branch
          %278 = sbr.rel (%p276) target = $region36
        $region35: #{tpu_custom_call.1} parent=11 // pred_region
          %s280 = ssub.s32 16, 16
          %281 = vsyncadd [#allocation12], %s280
          %s283 = sshll.u32 [#allocation13], 4
          %s284 = int_to_ptr.vmem [resolvable:$true] %s283
          %286 = dma.hbm_to_vmem [thread:$0]  %s6, 16, %s284, [#allocation12]
        $region36: #{tpu_custom_call.1} parent=11 // pred_fallthru
          _
      $region12: #{tpu_custom_call.1} parent=5 // pred_fallthru
        _
      %p287 = scmp.lt.s32.totalorder %s22, 2
      // Predicated region
      $region37: #{tpu_custom_call.1} parent=5 // pred_check
        %p288 = pneg %p287
      $region38: #{tpu_custom_call.1} parent=5 // pred_check_branch
        %290 = sbr.rel (%p288) target = $region40
      $region39: #{tpu_custom_call.1} parent=5 // pred_region
        // Predicated region
        $region41: #{tpu_custom_call.1} parent=39 // pred_check
          %p291 = pneg %p42
        $region42: #{tpu_custom_call.1} parent=39 // pred_check_branch
          %293 = sbr.rel (%p291) target = $region44
        $region43: #{tpu_custom_call.1} parent=39 // pred_region
          %s294 = sand.u32 %s32, 1
          %s295 = scalar_lea.sflag [#allocation3], %s294
          %s296 = sand.u32 %s32, 1
          %s297 = smul.addr %s296, 96
          %s298 = scalar_lea.vmem [#allocation2], %s297
          %s299 = smul.u32 2, %s22
          %s301 = ssub.s32 1536, 1536
          %302 = vsyncadd %s295, %s301
          %s303 = smul.addr %s299, 6
          %s304 = smul.addr %s303, 128
          %s305 = scalar_lea.hbm %s0, %s304
          %s306 = sshll.u32 %s298, 4
          %s307 = int_to_ptr.vmem [resolvable:$true] %s306
          %312 = dma.hbm_to_vmem [thread:$0]  %s305, 1536, %s307, %s295, 768, 768, 48
        $region44: #{tpu_custom_call.1} parent=39 // pred_fallthru
          _
      $region40: #{tpu_custom_call.1} parent=5 // pred_fallthru
        _
      %p313 = scmp.le.s32.totalorder 1, %s22
      %p314 = scmp.lt.s32.totalorder %s22, 3
      %p315 = pnand %p313, %p314
      %p316 = pneg %p315
      // Predicated region
      $region45: #{tpu_custom_call.1} parent=5 // pred_check
        _
      $region46: #{tpu_custom_call.1} parent=5 // pred_check_branch
        %318 = sbr.rel (%p315) target = $region48
      $region47: #{tpu_custom_call.1} parent=5 // pred_region
        %s319 = ssub.s32 %s22, 1
        %s320 = sand.u32 %s35, 1
        %s321 = scalar_lea.sflag [#allocation3], %s320
        %s322 = sand.u32 %s35, 1
        %s323 = smul.addr %s322, 96
        %s324 = scalar_lea.vmem [#allocation2], %s323
        // Predicated region
        $region49: #{tpu_custom_call.1} parent=47 // pred_check
          %p325 = pneg %p48
        $region50: #{tpu_custom_call.1} parent=47 // pred_check_branch
          %327 = sbr.rel (%p325) target = $region52
        $region51: #{tpu_custom_call.1} parent=47 // pred_region
          %328 = dma.done %s321, 1536
        $region52: #{tpu_custom_call.1} parent=47 // pred_fallthru
          _
        // Predicated region
        $region53: #{tpu_custom_call.1} parent=47 // pred_check
          %p329 = pneg %p69
        $region54: #{tpu_custom_call.1} parent=47 // pred_check_branch
          %331 = sbr.rel (%p329) target = $region56
        $region55: #{tpu_custom_call.1} parent=47 // pred_region
          %332 = dma.done [#allocation6], 36864
        $region56: #{tpu_custom_call.1} parent=47 // pred_fallthru
          _
        // Predicated region
        $region57: #{tpu_custom_call.1} parent=47 // pred_check
          %p333 = pneg %p90
        $region58: #{tpu_custom_call.1} parent=47 // pred_check_branch
          %335 = sbr.rel (%p333) target = $region60
        $region59: #{tpu_custom_call.1} parent=47 // pred_region
          %336 = dma.done [#allocation6], 18432
        $region60: #{tpu_custom_call.1} parent=47 // pred_fallthru
          _
        // Predicated region
        $region61: #{tpu_custom_call.1} parent=47 // pred_check
          %p337 = pneg %p111
        $region62: #{tpu_custom_call.1} parent=47 // pred_check_branch
          %339 = sbr.rel (%p337) target = $region64
        $region63: #{tpu_custom_call.1} parent=47 // pred_region
          %340 = dma.done [#allocation9], 24576
        $region64: #{tpu_custom_call.1} parent=47 // pred_fallthru
          _
        // Predicated region
        $region65: #{tpu_custom_call.1} parent=47 // pred_check
          %p341 = pneg %p132
        $region66: #{tpu_custom_call.1} parent=47 // pred_check_branch
          %343 = sbr.rel (%p341) target = $region68
        $region67: #{tpu_custom_call.1} parent=47 // pred_region
          %344 = dma.done [#allocation9], 48
        $region68: #{tpu_custom_call.1} parent=47 // pred_fallthru
          _
        // Predicated region
        $region69: #{tpu_custom_call.1} parent=47 // pred_check
          %p345 = pneg %p153
        $region70: #{tpu_custom_call.1} parent=47 // pred_check_branch
          %347 = sbr.rel (%p345) target = $region72
        $region71: #{tpu_custom_call.1} parent=47 // pred_region
          %348 = dma.done [#allocation12], 48
        $region72: #{tpu_custom_call.1} parent=47 // pred_fallthru
          _
        // Predicated region
        $region73: #{tpu_custom_call.1} parent=47 // pred_check
          %p349 = pneg %p174
        $region74: #{tpu_custom_call.1} parent=47 // pred_check_branch
          %351 = sbr.rel (%p349) target = $region76
        $region75: #{tpu_custom_call.1} parent=47 // pred_region
          %352 = dma.done [#allocation12], 16
        $region76: #{tpu_custom_call.1} parent=47 // pred_fallthru
          _
        %s353 = sand.u32 %s35, 1
        %s354 = scalar_lea.sflag [#allocation3], %s353
        %s355 = sand.u32 %s35, 1
        %s356 = smul.addr %s355, 96
        %s357 = scalar_lea.vmem [#allocation2], %s356
        %p358 = pneg %p48
        %p359 = pneg %p45
        %p360 = pneg %p69
        %p361 = pneg %p66
        %p362 = pneg %p90
        %p363 = pneg %p87
        %p364 = pneg %p111
        %p365 = pneg %p108
        %p366 = pneg %p132
        %p367 = pneg %p129
        %p368 = pneg %p153
        %p369 = pneg %p150
        %p370 = pneg %p174
        %p371 = pneg %p171
        %p372 = pneg %p200
        %p373 = pneg %p197
        %s374 = sand.u32 %s187, 1
        %s375 = scalar_lea.sflag [#allocation4], %s374
        %s376 = sand.u32 %s187, 1
        %s377 = smul.addr %s376, 16
        %s378 = scalar_lea.vmem [#allocation14], %s377
        %s379 = smul.u32 2, %s27
        %s380 = smul.u32 2, %s27
        %v381 = vld [vmem:[%s324] sm:$0xff]
        %v382 = vld [vmem:[%s324 + $0x8] sm:$0xff]
        %v383 = vld [vmem:[%s324 + $0x10] sm:$0xff]
        %v384 = vld [vmem:[%s324 + $0x18] sm:$0xff]
        %v385 = vld [vmem:[%s324 + $0x20] sm:$0xff]
        %v386 = vld [vmem:[%s324 + $0x28] sm:$0xff]
        %v387 = vld [vmem:[%s324 + $0x30] sm:$0xff]
        %v388 = vld [vmem:[%s324 + $0x38] sm:$0xff]
        %v389 = vld [vmem:[%s324 + $0x40] sm:$0xff]
        %v390 = vld [vmem:[%s324 + $0x48] sm:$0xff]
        %v391 = vld [vmem:[%s324 + $0x50] sm:$0xff]
        %v392 = vld [vmem:[%s324 + $0x58] sm:$0xff]
        %v393 = vld [vmem:[#allocation5] sm:$0xff]
        %v394 = vld [vmem:[#allocation5 + $0x8] sm:$0xff]
        %v395 = vld [vmem:[#allocation5 + $0x10] sm:$0xff]
        %v396 = vld [vmem:[#allocation5 + $0x18] sm:$0xff]
        %v397 = vld [vmem:[#allocation5 + $0x20] sm:$0xff]
        %v398 = vld [vmem:[#allocation5 + $0x28] sm:$0xff]
        %v399 = vld [vmem:[#allocation5 + $0x30] sm:$0xff]
        %v400 = vld [vmem:[#allocation5 + $0x38] sm:$0xff]
        %v401 = vld [vmem:[#allocation5 + $0x40] sm:$0xff]
        %v402 = vld [vmem:[#allocation5 + $0x48] sm:$0xff]
        %v403 = vld [vmem:[#allocation5 + $0x50] sm:$0xff]
        %v404 = vld [vmem:[#allocation5 + $0x58] sm:$0xff]
        %v405 = vld [vmem:[#allocation5 + $0x60] sm:$0xff]
        %v406 = vld [vmem:[#allocation5 + $0x68] sm:$0xff]
        %v407 = vld [vmem:[#allocation5 + $0x70] sm:$0xff]
        %v408 = vld [vmem:[#allocation5 + $0x78] sm:$0xff]
        %v409 = vld [vmem:[#allocation5 + $0x80] sm:$0xff]
        %v410 = vld [vmem:[#allocation5 + $0x88] sm:$0xff]
        %v411 = vld [vmem:[#allocation5 + $0x90] sm:$0xff]
        %v412 = vld [vmem:[#allocation5 + $0x98] sm:$0xff]
        %v413 = vld [vmem:[#allocation5 + $0xa0] sm:$0xff]
        %v414 = vld [vmem:[#allocation5 + $0xa8] sm:$0xff]
        %v415 = vld [vmem:[#allocation5 + $0xb0] sm:$0xff]
        %v416 = vld [vmem:[#allocation5 + $0xb8] sm:$0xff]
        %v417 = vld [vmem:[#allocation5 + $0xc0] sm:$0xff]
        %v418 = vld [vmem:[#allocation5 + $0xc8] sm:$0xff]
        %v419 = vld [vmem:[#allocation5 + $0xd0] sm:$0xff]
        %v420 = vld [vmem:[#allocation5 + $0xd8] sm:$0xff]
        %v421 = vld [vmem:[#allocation5 + $0xe0] sm:$0xff]
        %v422 = vld [vmem:[#allocation5 + $0xe8] sm:$0xff]
        %v423 = vld [vmem:[#allocation5 + $0xf0] sm:$0xff]
        %v424 = vld [vmem:[#allocation5 + $0xf8] sm:$0xff]
        %v425 = vld [vmem:[#allocation5 + $0x100] sm:$0xff]
        %v426 = vld [vmem:[#allocation5 + $0x108] sm:$0xff]
        %v427 = vld [vmem:[#allocation5 + $0x110] sm:$0xff]
        %v428 = vld [vmem:[#allocation5 + $0x118] sm:$0xff]
        %v429 = vld [vmem:[#allocation5 + $0x120] sm:$0xff]
        %v430 = vld [vmem:[#allocation5 + $0x128] sm:$0xff]
        %v431 = vld [vmem:[#allocation5 + $0x130] sm:$0xff]
        %v432 = vld [vmem:[#allocation5 + $0x138] sm:$0xff]
        %v433 = vld [vmem:[#allocation5 + $0x140] sm:$0xff]
        %v434 = vld [vmem:[#allocation5 + $0x148] sm:$0xff]
        %v435 = vld [vmem:[#allocation5 + $0x150] sm:$0xff]
        %v436 = vld [vmem:[#allocation5 + $0x158] sm:$0xff]
        %v437 = vld [vmem:[#allocation5 + $0x160] sm:$0xff]
        %v438 = vld [vmem:[#allocation5 + $0x168] sm:$0xff]
        %v439 = vld [vmem:[#allocation5 + $0x170] sm:$0xff]
        %v440 = vld [vmem:[#allocation5 + $0x178] sm:$0xff]
        %v441 = vld [vmem:[#allocation5 + $0x180] sm:$0xff]
        %v442 = vld [vmem:[#allocation5 + $0x188] sm:$0xff]
        %v443 = vld [vmem:[#allocation5 + $0x190] sm:$0xff]
        %v444 = vld [vmem:[#allocation5 + $0x198] sm:$0xff]
        %v445 = vld [vmem:[#allocation5 + $0x1a0] sm:$0xff]
        %v446 = vld [vmem:[#allocation5 + $0x1a8] sm:$0xff]
        %v447 = vld [vmem:[#allocation5 + $0x1b0] sm:$0xff]
        %v448 = vld [vmem:[#allocation5 + $0x1b8] sm:$0xff]
        %v449 = vld [vmem:[#allocation5 + $0x1c0] sm:$0xff]
        %v450 = vld [vmem:[#allocation5 + $0x1c8] sm:$0xff]
        %v451 = vld [vmem:[#allocation5 + $0x1d0] sm:$0xff]
        %v452 = vld [vmem:[#allocation5 + $0x1d8] sm:$0xff]
        %v453 = vld [vmem:[#allocation5 + $0x1e0] sm:$0xff]
        %v454 = vld [vmem:[#allocation5 + $0x1e8] sm:$0xff]
        %v455 = vld [vmem:[#allocation5 + $0x1f0] sm:$0xff]
        %v456 = vld [vmem:[#allocation5 + $0x1f8] sm:$0xff]
        %v457 = vld [vmem:[#allocation5 + $0x200] sm:$0xff]
        %v458 = vld [vmem:[#allocation5 + $0x208] sm:$0xff]
        %v459 = vld [vmem:[#allocation5 + $0x210] sm:$0xff]
        %v460 = vld [vmem:[#allocation5 + $0x218] sm:$0xff]
        %v461 = vld [vmem:[#allocation5 + $0x220] sm:$0xff]
        %v462 = vld [vmem:[#allocation5 + $0x228] sm:$0xff]
        %v463 = vld [vmem:[#allocation5 + $0x230] sm:$0xff]
        %v464 = vld [vmem:[#allocation5 + $0x238] sm:$0xff]
        %v465 = vld [vmem:[#allocation5 + $0x240] sm:$0xff]
        %v466 = vld [vmem:[#allocation5 + $0x248] sm:$0xff]
        %v467 = vld [vmem:[#allocation5 + $0x250] sm:$0xff]
        %v468 = vld [vmem:[#allocation5 + $0x258] sm:$0xff]
        %v469 = vld [vmem:[#allocation5 + $0x260] sm:$0xff]
        %v470 = vld [vmem:[#allocation5 + $0x268] sm:$0xff]
        %v471 = vld [vmem:[#allocation5 + $0x270] sm:$0xff]
        %v472 = vld [vmem:[#allocation5 + $0x278] sm:$0xff]
        %v473 = vld [vmem:[#allocation5 + $0x280] sm:$0xff]
        %v474 = vld [vmem:[#allocation5 + $0x288] sm:$0xff]
        %v475 = vld [vmem:[#allocation5 + $0x290] sm:$0xff]
        %v476 = vld [vmem:[#allocation5 + $0x298] sm:$0xff]
        %v477 = vld [vmem:[#allocation5 + $0x2a0] sm:$0xff]
        %v478 = vld [vmem:[#allocation5 + $0x2a8] sm:$0xff]
        %v479 = vld [vmem:[#allocation5 + $0x2b0] sm:$0xff]
        %v480 = vld [vmem:[#allocation5 + $0x2b8] sm:$0xff]
        %v481 = vld [vmem:[#allocation5 + $0x2c0] sm:$0xff]
        %v482 = vld [vmem:[#allocation5 + $0x2c8] sm:$0xff]
        %v483 = vld [vmem:[#allocation5 + $0x2d0] sm:$0xff]
        %v484 = vld [vmem:[#allocation5 + $0x2d8] sm:$0xff]
        %v485 = vld [vmem:[#allocation5 + $0x2e0] sm:$0xff]
        %v486 = vld [vmem:[#allocation5 + $0x2e8] sm:$0xff]
        %v487 = vld [vmem:[#allocation5 + $0x2f0] sm:$0xff]
        %v488 = vld [vmem:[#allocation5 + $0x2f8] sm:$0xff]
        %v489 = vld [vmem:[#allocation5 + $0x300] sm:$0xff]
        %v490 = vld [vmem:[#allocation5 + $0x308] sm:$0xff]
        %v491 = vld [vmem:[#allocation5 + $0x310] sm:$0xff]
        %v492 = vld [vmem:[#allocation5 + $0x318] sm:$0xff]
        %v493 = vld [vmem:[#allocation5 + $0x320] sm:$0xff]
        %v494 = vld [vmem:[#allocation5 + $0x328] sm:$0xff]
        %v495 = vld [vmem:[#allocation5 + $0x330] sm:$0xff]
        %v496 = vld [vmem:[#allocation5 + $0x338] sm:$0xff]
        %v497 = vld [vmem:[#allocation5 + $0x340] sm:$0xff]
        %v498 = vld [vmem:[#allocation5 + $0x348] sm:$0xff]
        %v499 = vld [vmem:[#allocation5 + $0x350] sm:$0xff]
        %v500 = vld [vmem:[#allocation5 + $0x358] sm:$0xff]
        %v501 = vld [vmem:[#allocation5 + $0x360] sm:$0xff]
        %v502 = vld [vmem:[#allocation5 + $0x368] sm:$0xff]
        %v503 = vld [vmem:[#allocation5 + $0x370] sm:$0xff]
        %v504 = vld [vmem:[#allocation5 + $0x378] sm:$0xff]
        %v505 = vld [vmem:[#allocation5 + $0x380] sm:$0xff]
        %v506 = vld [vmem:[#allocation5 + $0x388] sm:$0xff]
        %v507 = vld [vmem:[#allocation5 + $0x390] sm:$0xff]
        %v508 = vld [vmem:[#allocation5 + $0x398] sm:$0xff]
        %v509 = vld [vmem:[#allocation5 + $0x3a0] sm:$0xff]
        %v510 = vld [vmem:[#allocation5 + $0x3a8] sm:$0xff]
        %v511 = vld [vmem:[#allocation5 + $0x3b0] sm:$0xff]
        %v512 = vld [vmem:[#allocation5 + $0x3b8] sm:$0xff]
        %v513 = vld [vmem:[#allocation5 + $0x3c0] sm:$0xff]
        %v514 = vld [vmem:[#allocation5 + $0x3c8] sm:$0xff]
        %v515 = vld [vmem:[#allocation5 + $0x3d0] sm:$0xff]
        %v516 = vld [vmem:[#allocation5 + $0x3d8] sm:$0xff]
        %v517 = vld [vmem:[#allocation5 + $0x3e0] sm:$0xff]
        %v518 = vld [vmem:[#allocation5 + $0x3e8] sm:$0xff]
        %v519 = vld [vmem:[#allocation5 + $0x3f0] sm:$0xff]
        %v520 = vld [vmem:[#allocation5 + $0x3f8] sm:$0xff]
        %v521 = vld [vmem:[#allocation5 + $0x400] sm:$0xff]
        %v522 = vld [vmem:[#allocation5 + $0x408] sm:$0xff]
        %v523 = vld [vmem:[#allocation5 + $0x410] sm:$0xff]
        %v524 = vld [vmem:[#allocation5 + $0x418] sm:$0xff]
        %v525 = vld [vmem:[#allocation5 + $0x420] sm:$0xff]
        %v526 = vld [vmem:[#allocation5 + $0x428] sm:$0xff]
        %v527 = vld [vmem:[#allocation5 + $0x430] sm:$0xff]
        %v528 = vld [vmem:[#allocation5 + $0x438] sm:$0xff]
        %v529 = vld [vmem:[#allocation5 + $0x440] sm:$0xff]
        %v530 = vld [vmem:[#allocation5 + $0x448] sm:$0xff]
        %v531 = vld [vmem:[#allocation5 + $0x450] sm:$0xff]
        %v532 = vld [vmem:[#allocation5 + $0x458] sm:$0xff]
        %v533 = vld [vmem:[#allocation5 + $0x460] sm:$0xff]
        %v534 = vld [vmem:[#allocation5 + $0x468] sm:$0xff]
        %v535 = vld [vmem:[#allocation5 + $0x470] sm:$0xff]
        %v536 = vld [vmem:[#allocation5 + $0x478] sm:$0xff]
        %v537 = vld [vmem:[#allocation5 + $0x480] sm:$0xff]
        %v538 = vld [vmem:[#allocation5 + $0x488] sm:$0xff]
        %v539 = vld [vmem:[#allocation5 + $0x490] sm:$0xff]
        %v540 = vld [vmem:[#allocation5 + $0x498] sm:$0xff]
        %v541 = vld [vmem:[#allocation5 + $0x4a0] sm:$0xff]
        %v542 = vld [vmem:[#allocation5 + $0x4a8] sm:$0xff]
        %v543 = vld [vmem:[#allocation5 + $0x4b0] sm:$0xff]
        %v544 = vld [vmem:[#allocation5 + $0x4b8] sm:$0xff]
        %v545 = vld [vmem:[#allocation5 + $0x4c0] sm:$0xff]
        %v546 = vld [vmem:[#allocation5 + $0x4c8] sm:$0xff]
        %v547 = vld [vmem:[#allocation5 + $0x4d0] sm:$0xff]
        %v548 = vld [vmem:[#allocation5 + $0x4d8] sm:$0xff]
        %v549 = vld [vmem:[#allocation5 + $0x4e0] sm:$0xff]
        %v550 = vld [vmem:[#allocation5 + $0x4e8] sm:$0xff]
        %v551 = vld [vmem:[#allocation5 + $0x4f0] sm:$0xff]
        %v552 = vld [vmem:[#allocation5 + $0x4f8] sm:$0xff]
        %v553 = vld [vmem:[#allocation5 + $0x500] sm:$0xff]
        %v554 = vld [vmem:[#allocation5 + $0x508] sm:$0xff]
        %v555 = vld [vmem:[#allocation5 + $0x510] sm:$0xff]
        %v556 = vld [vmem:[#allocation5 + $0x518] sm:$0xff]
        %v557 = vld [vmem:[#allocation5 + $0x520] sm:$0xff]
        %v558 = vld [vmem:[#allocation5 + $0x528] sm:$0xff]
        %v559 = vld [vmem:[#allocation5 + $0x530] sm:$0xff]
        %v560 = vld [vmem:[#allocation5 + $0x538] sm:$0xff]
        %v561 = vld [vmem:[#allocation5 + $0x540] sm:$0xff]
        %v562 = vld [vmem:[#allocation5 + $0x548] sm:$0xff]
        %v563 = vld [vmem:[#allocation5 + $0x550] sm:$0xff]
        %v564 = vld [vmem:[#allocation5 + $0x558] sm:$0xff]
        %v565 = vld [vmem:[#allocation5 + $0x560] sm:$0xff]
        %v566 = vld [vmem:[#allocation5 + $0x568] sm:$0xff]
        %v567 = vld [vmem:[#allocation5 + $0x570] sm:$0xff]
        %v568 = vld [vmem:[#allocation5 + $0x578] sm:$0xff]
        %v569 = vld [vmem:[#allocation5 + $0x580] sm:$0xff]
        %v570 = vld [vmem:[#allocation5 + $0x588] sm:$0xff]
        %v571 = vld [vmem:[#allocation5 + $0x590] sm:$0xff]
        %v572 = vld [vmem:[#allocation5 + $0x598] sm:$0xff]
        %v573 = vld [vmem:[#allocation5 + $0x5a0] sm:$0xff]
        %v574 = vld [vmem:[#allocation5 + $0x5a8] sm:$0xff]
        %v575 = vld [vmem:[#allocation5 + $0x5b0] sm:$0xff]
        %v576 = vld [vmem:[#allocation5 + $0x5b8] sm:$0xff]
        %v577 = vld [vmem:[#allocation5 + $0x5c0] sm:$0xff]
        %v578 = vld [vmem:[#allocation5 + $0x5c8] sm:$0xff]
        %v579 = vld [vmem:[#allocation5 + $0x5d0] sm:$0xff]
        %v580 = vld [vmem:[#allocation5 + $0x5d8] sm:$0xff]
        %v581 = vld [vmem:[#allocation5 + $0x5e0] sm:$0xff]
        %v582 = vld [vmem:[#allocation5 + $0x5e8] sm:$0xff]
        %v583 = vld [vmem:[#allocation5 + $0x5f0] sm:$0xff]
        %v584 = vld [vmem:[#allocation5 + $0x5f8] sm:$0xff]
        %v585 = vld [vmem:[#allocation5 + $0x600] sm:$0xff]
        %v586 = vld [vmem:[#allocation5 + $0x608] sm:$0xff]
        %v587 = vld [vmem:[#allocation5 + $0x610] sm:$0xff]
        %v588 = vld [vmem:[#allocation5 + $0x618] sm:$0xff]
        %v589 = vld [vmem:[#allocation5 + $0x620] sm:$0xff]
        %v590 = vld [vmem:[#allocation5 + $0x628] sm:$0xff]
        %v591 = vld [vmem:[#allocation5 + $0x630] sm:$0xff]
        %v592 = vld [vmem:[#allocation5 + $0x638] sm:$0xff]
        %v593 = vld [vmem:[#allocation5 + $0x640] sm:$0xff]
        %v594 = vld [vmem:[#allocation5 + $0x648] sm:$0xff]
        %v595 = vld [vmem:[#allocation5 + $0x650] sm:$0xff]
        %v596 = vld [vmem:[#allocation5 + $0x658] sm:$0xff]
        %v597 = vld [vmem:[#allocation5 + $0x660] sm:$0xff]
        %v598 = vld [vmem:[#allocation5 + $0x668] sm:$0xff]
        %v599 = vld [vmem:[#allocation5 + $0x670] sm:$0xff]
        %v600 = vld [vmem:[#allocation5 + $0x678] sm:$0xff]
        %v601 = vld [vmem:[#allocation5 + $0x680] sm:$0xff]
        %v602 = vld [vmem:[#allocation5 + $0x688] sm:$0xff]
        %v603 = vld [vmem:[#allocation5 + $0x690] sm:$0xff]
        %v604 = vld [vmem:[#allocation5 + $0x698] sm:$0xff]
        %v605 = vld [vmem:[#allocation5 + $0x6a0] sm:$0xff]
        %v606 = vld [vmem:[#allocation5 + $0x6a8] sm:$0xff]
        %v607 = vld [vmem:[#allocation5 + $0x6b0] sm:$0xff]
        %v608 = vld [vmem:[#allocation5 + $0x6b8] sm:$0xff]
        %v609 = vld [vmem:[#allocation5 + $0x6c0] sm:$0xff]
        %v610 = vld [vmem:[#allocation5 + $0x6c8] sm:$0xff]
        %v611 = vld [vmem:[#allocation5 + $0x6d0] sm:$0xff]
        %v612 = vld [vmem:[#allocation5 + $0x6d8] sm:$0xff]
        %v613 = vld [vmem:[#allocation5 + $0x6e0] sm:$0xff]
        %v614 = vld [vmem:[#allocation5 + $0x6e8] sm:$0xff]
        %v615 = vld [vmem:[#allocation5 + $0x6f0] sm:$0xff]
        %v616 = vld [vmem:[#allocation5 + $0x6f8] sm:$0xff]
        %v617 = vld [vmem:[#allocation5 + $0x700] sm:$0xff]
        %v618 = vld [vmem:[#allocation5 + $0x708] sm:$0xff]
        %v619 = vld [vmem:[#allocation5 + $0x710] sm:$0xff]
        %v620 = vld [vmem:[#allocation5 + $0x718] sm:$0xff]
        %v621 = vld [vmem:[#allocation5 + $0x720] sm:$0xff]
        %v622 = vld [vmem:[#allocation5 + $0x728] sm:$0xff]
        %v623 = vld [vmem:[#allocation5 + $0x730] sm:$0xff]
        %v624 = vld [vmem:[#allocation5 + $0x738] sm:$0xff]
        %v625 = vld [vmem:[#allocation5 + $0x740] sm:$0xff]
        %v626 = vld [vmem:[#allocation5 + $0x748] sm:$0xff]
        %v627 = vld [vmem:[#allocation5 + $0x750] sm:$0xff]
        %v628 = vld [vmem:[#allocation5 + $0x758] sm:$0xff]
        %v629 = vld [vmem:[#allocation5 + $0x760] sm:$0xff]
        %v630 = vld [vmem:[#allocation5 + $0x768] sm:$0xff]
        %v631 = vld [vmem:[#allocation5 + $0x770] sm:$0xff]
        %v632 = vld [vmem:[#allocation5 + $0x778] sm:$0xff]
        %v633 = vld [vmem:[#allocation5 + $0x780] sm:$0xff]
        %v634 = vld [vmem:[#allocation5 + $0x788] sm:$0xff]
        %v635 = vld [vmem:[#allocation5 + $0x790] sm:$0xff]
        %v636 = vld [vmem:[#allocation5 + $0x798] sm:$0xff]
        %v637 = vld [vmem:[#allocation5 + $0x7a0] sm:$0xff]
        %v638 = vld [vmem:[#allocation5 + $0x7a8] sm:$0xff]
        %v639 = vld [vmem:[#allocation5 + $0x7b0] sm:$0xff]
        %v640 = vld [vmem:[#allocation5 + $0x7b8] sm:$0xff]
        %v641 = vld [vmem:[#allocation5 + $0x7c0] sm:$0xff]
        %v642 = vld [vmem:[#allocation5 + $0x7c8] sm:$0xff]
        %v643 = vld [vmem:[#allocation5 + $0x7d0] sm:$0xff]
        %v644 = vld [vmem:[#allocation5 + $0x7d8] sm:$0xff]
        %v645 = vld [vmem:[#allocation5 + $0x7e0] sm:$0xff]
        %v646 = vld [vmem:[#allocation5 + $0x7e8] sm:$0xff]
        %v647 = vld [vmem:[#allocation5 + $0x7f0] sm:$0xff]
        %v648 = vld [vmem:[#allocation5 + $0x7f8] sm:$0xff]
        %v649 = vld [vmem:[#allocation5 + $0x800] sm:$0xff]
        %v650 = vld [vmem:[#allocation5 + $0x808] sm:$0xff]
        %v651 = vld [vmem:[#allocation5 + $0x810] sm:$0xff]
        %v652 = vld [vmem:[#allocation5 + $0x818] sm:$0xff]
        %v653 = vld [vmem:[#allocation5 + $0x820] sm:$0xff]
        %v654 = vld [vmem:[#allocation5 + $0x828] sm:$0xff]
        %v655 = vld [vmem:[#allocation5 + $0x830] sm:$0xff]
        %v656 = vld [vmem:[#allocation5 + $0x838] sm:$0xff]
        %v657 = vld [vmem:[#allocation5 + $0x840] sm:$0xff]
        %v658 = vld [vmem:[#allocation5 + $0x848] sm:$0xff]
        %v659 = vld [vmem:[#allocation5 + $0x850] sm:$0xff]
        %v660 = vld [vmem:[#allocation5 + $0x858] sm:$0xff]
        %v661 = vld [vmem:[#allocation5 + $0x860] sm:$0xff]
        %v662 = vld [vmem:[#allocation5 + $0x868] sm:$0xff]
        %v663 = vld [vmem:[#allocation5 + $0x870] sm:$0xff]
        %v664 = vld [vmem:[#allocation5 + $0x878] sm:$0xff]
        %v665 = vld [vmem:[#allocation5 + $0x880] sm:$0xff]
        %v666 = vld [vmem:[#allocation5 + $0x888] sm:$0xff]
        %v667 = vld [vmem:[#allocation5 + $0x890] sm:$0xff]
        %v668 = vld [vmem:[#allocation5 + $0x898] sm:$0xff]
        %v669 = vld [vmem:[#allocation5 + $0x8a0] sm:$0xff]
        %v670 = vld [vmem:[#allocation5 + $0x8a8] sm:$0xff]
        %v671 = vld [vmem:[#allocation5 + $0x8b0] sm:$0xff]
        %v672 = vld [vmem:[#allocation5 + $0x8b8] sm:$0xff]
        %v673 = vld [vmem:[#allocation5 + $0x8c0] sm:$0xff]
        %v674 = vld [vmem:[#allocation5 + $0x8c8] sm:$0xff]
        %v675 = vld [vmem:[#allocation5 + $0x8d0] sm:$0xff]
        %v676 = vld [vmem:[#allocation5 + $0x8d8] sm:$0xff]
        %v677 = vld [vmem:[#allocation5 + $0x8e0] sm:$0xff]
        %v678 = vld [vmem:[#allocation5 + $0x8e8] sm:$0xff]
        %v679 = vld [vmem:[#allocation5 + $0x8f0] sm:$0xff]
        %v680 = vld [vmem:[#allocation5 + $0x8f8] sm:$0xff]
        %v681 = vld [vmem:[#allocation10] sm:$0x7]
        %v683 = vlaneseq
        %v684 = vshrl.u32 %v683, 7
        %v685 = vsub.s32 0, %v684
        %v686 = vrot.slane %v681, %v685
        %v687 = vlaneseq
        %v688 = vshrl.u32 %v687, 7
        %v689 = vsub.s32 1, %v688
        %v690 = vrot.slane %v681, %v689
        %v691 = vlaneseq
        %v692 = vshrl.u32 %v691, 7
        %v693 = vsub.s32 2, %v692
        %v694 = vrot.slane %v681, %v693
        %698 = vmatprep.subr.mxu0 %v394
        %699 = vmatpush1.msra.mxu0 %v393
        %700 = vmatprep.subr.mxu0 %v397
        %701 = vmatpush1.msra.mxu0 %v396
        %702 = vmatprep.subr.mxu0 %v400
        %703 = vmatpush1.msra.mxu0 %v399
        %704 = vmatprep.subr.mxu0 %v403
        %705 = vmatpush1.msra.mxu0 %v402
        %706 = vmatprep.subr.mxu0 %v406
        %707 = vmatpush1.msra.mxu0 %v405
        %708 = vmatprep.subr.mxu0 %v409
        %709 = vmatpush1.msra.mxu0 %v408
        %710 = vmatprep.subr.mxu0 %v412
        %711 = vmatpush1.msra.mxu0 %v411
        %712 = vmatprep.subr.mxu0 %v415
        %713 = vmatpush1.msra.mxu0 %v414
        %714 = vmatprep.subr.mxu0 %v418
        %715 = vmatpush1.msra.mxu0 %v417
        %716 = vmatprep.subr.mxu0 %v421
        %717 = vmatpush1.msra.mxu0 %v420
        %718 = vmatprep.subr.mxu0 %v424
        %719 = vmatpush1.msra.mxu0 %v423
        %720 = vmatprep.subr.mxu0 %v427
        %721 = vmatpush1.msra.mxu0 %v426
        %722 = vmatprep.subr.mxu0 %v430
        %723 = vmatpush1.msra.mxu0 %v429
        %724 = vmatprep.subr.mxu0 %v433
        %725 = vmatpush1.msra.mxu0 %v432
        %726 = vmatprep.subr.mxu0 %v436
        %727 = vmatpush1.msra.mxu0 %v435
        %728 = vmatprep.subr.mxu0 %v439
        %729 = vmatpush1.msra.mxu0 %v438
        %730 = vmatprep.subr.mxu0 %v442
        %731 = vmatpush1.msra.mxu0 %v441
        %732 = vmatprep.subr.mxu0 %v445
        %733 = vmatpush1.msra.mxu0 %v444
        %734 = vmatprep.subr.mxu0 %v448
        %735 = vmatpush1.msra.mxu0 %v447
        %736 = vmatprep.subr.mxu0 %v451
        %737 = vmatpush1.msra.mxu0 %v450
        %738 = vmatprep.subr.mxu0 %v454
        %739 = vmatpush1.msra.mxu0 %v453
        %740 = vmatprep.subr.mxu0 %v457
        %741 = vmatpush1.msra.mxu0 %v456
        %742 = vmatprep.subr.mxu0 %v460
        %743 = vmatpush1.msra.mxu0 %v459
        %744 = vmatprep.subr.mxu0 %v463
        %745 = vmatpush1.msra.mxu0 %v462
        %746 = vmatprep.subr.mxu0 %v466
        %747 = vmatpush1.msra.mxu0 %v465
        %748 = vmatprep.subr.mxu0 %v469
        %749 = vmatpush1.msra.mxu0 %v468
        %750 = vmatprep.subr.mxu0 %v472
        %751 = vmatpush1.msra.mxu0 %v471
        %752 = vmatprep.subr.mxu0 %v475
        %753 = vmatpush1.msra.mxu0 %v474
        %754 = vmatprep.subr.mxu0 %v478
        %755 = vmatpush1.msra.mxu0 %v477
        %756 = vmatprep.subr.mxu0 %v481
        %757 = vmatpush1.msra.mxu0 %v480
        %758 = vmatprep.subr.mxu0 %v484
        %759 = vmatpush1.msra.mxu0 %v483
        %760 = vmatprep.subr.mxu0 %v487
        %761 = vmatpush1.msra.mxu0 %v486
        %762 = vmatprep.mubr.f32.mxu0 %v382
        %763 = vmatmul.mubr.f32.gmra.mrb[0].mxu0 %v381
        %v764 = vpop.f32.mrb[0].mxu0
        %v765 = vadd.f32 %v686, %v764
        %v766 = vpop.f32.mrb[0].mxu0
        %v767 = vadd.f32 %v690, %v766
        %768 = vmatprep.mubr.f32.mxu0 %v388
        %769 = vmatmul.mubr.f32.gmra.mrb[0].mxu0 %v387
        %v770 = vpop.f32.mrb[0].mxu0
        %v771 = vadd.f32 %v686, %v770
        %v772 = vpop.f32.mrb[0].mxu0
        %v773 = vadd.f32 %v690, %v772
        %774 = vdwg.mxu0
        %775 = vmatprep.subr.mxu0 %v490
        %776 = vmatpush1.msra.mxu0 %v489
        %777 = vmatprep.subr.mxu0 %v493
        %778 = vmatpush1.msra.mxu0 %v492
        %779 = vmatprep.subr.mxu0 %v496
        %780 = vmatpush1.msra.mxu0 %v495
        %781 = vmatprep.subr.mxu0 %v499
        %782 = vmatpush1.msra.mxu0 %v498
        %783 = vmatprep.subr.mxu0 %v502
        %784 = vmatpush1.msra.mxu0 %v501
        %785 = vmatprep.subr.mxu0 %v505
        %786 = vmatpush1.msra.mxu0 %v504
        %787 = vmatprep.subr.mxu0 %v508
        %788 = vmatpush1.msra.mxu0 %v507
        %789 = vmatprep.subr.mxu0 %v511
        %790 = vmatpush1.msra.mxu0 %v510
        %791 = vmatprep.subr.mxu0 %v514
        %792 = vmatpush1.msra.mxu0 %v513
        %793 = vmatprep.subr.mxu0 %v517
        %794 = vmatpush1.msra.mxu0 %v516
        %795 = vmatprep.subr.mxu0 %v520
        %796 = vmatpush1.msra.mxu0 %v519
        %797 = vmatprep.subr.mxu0 %v523
        %798 = vmatpush1.msra.mxu0 %v522
        %799 = vmatprep.subr.mxu0 %v526
        %800 = vmatpush1.msra.mxu0 %v525
        %801 = vmatprep.subr.mxu0 %v529
        %802 = vmatpush1.msra.mxu0 %v528
        %803 = vmatprep.subr.mxu0 %v532
        %804 = vmatpush1.msra.mxu0 %v531
        %805 = vmatprep.subr.mxu0 %v535
        %806 = vmatpush1.msra.mxu0 %v534
        %807 = vmatprep.subr.mxu0 %v538
        %808 = vmatpush1.msra.mxu0 %v537
        %809 = vmatprep.subr.mxu0 %v541
        %810 = vmatpush1.msra.mxu0 %v540
        %811 = vmatprep.subr.mxu0 %v544
        %812 = vmatpush1.msra.mxu0 %v543
        %813 = vmatprep.subr.mxu0 %v547
        %814 = vmatpush1.msra.mxu0 %v546
        %815 = vmatprep.subr.mxu0 %v550
        %816 = vmatpush1.msra.mxu0 %v549
        %817 = vmatprep.subr.mxu0 %v553
        %818 = vmatpush1.msra.mxu0 %v552
        %819 = vmatprep.subr.mxu0 %v556
        %820 = vmatpush1.msra.mxu0 %v555
        %821 = vmatprep.subr.mxu0 %v559
        %822 = vmatpush1.msra.mxu0 %v558
        %823 = vmatprep.subr.mxu0 %v562
        %824 = vmatpush1.msra.mxu0 %v561
        %825 = vmatprep.subr.mxu0 %v565
        %826 = vmatpush1.msra.mxu0 %v564
        %827 = vmatprep.subr.mxu0 %v568
        %828 = vmatpush1.msra.mxu0 %v567
        %829 = vmatprep.subr.mxu0 %v571
        %830 = vmatpush1.msra.mxu0 %v570
        %831 = vmatprep.subr.mxu0 %v574
        %832 = vmatpush1.msra.mxu0 %v573
        %833 = vmatprep.subr.mxu0 %v577
        %834 = vmatpush1.msra.mxu0 %v576
        %835 = vmatprep.subr.mxu0 %v580
        %836 = vmatpush1.msra.mxu0 %v579
        %837 = vmatprep.subr.mxu0 %v583
        %838 = vmatpush1.msra.mxu0 %v582
        %839 = vmatprep.mubr.f32.mxu0 %v384
        %840 = vmatmul.mubr.f32.gmra.mrb[0].mxu0 %v383
        %v841 = vpop.f32.mrb[0].mxu0
        %v842 = vadd.f32 %v765, %v841
        %v843 = vpop.f32.mrb[0].mxu0
        %v844 = vadd.f32 %v767, %v843
        %845 = vmatprep.mubr.f32.mxu0 %v390
        %846 = vmatmul.mubr.f32.gmra.mrb[0].mxu0 %v389
        %v847 = vpop.f32.mrb[0].mxu0
        %v848 = vadd.f32 %v771, %v847
        %v849 = vpop.f32.mrb[0].mxu0
        %v850 = vadd.f32 %v773, %v849
        %851 = vdwg.mxu0
        %852 = vmatprep.subr.mxu0 %v586
        %853 = vmatpush1.msra.mxu0 %v585
        %854 = vmatprep.subr.mxu0 %v589
        %855 = vmatpush1.msra.mxu0 %v588
        %856 = vmatprep.subr.mxu0 %v592
        %857 = vmatpush1.msra.mxu0 %v591
        %858 = vmatprep.subr.mxu0 %v595
        %859 = vmatpush1.msra.mxu0 %v594
        %860 = vmatprep.subr.mxu0 %v598
        %861 = vmatpush1.msra.mxu0 %v597
        %862 = vmatprep.subr.mxu0 %v601
        %863 = vmatpush1.msra.mxu0 %v600
        %864 = vmatprep.subr.mxu0 %v604
        %865 = vmatpush1.msra.mxu0 %v603
        %866 = vmatprep.subr.mxu0 %v607
        %867 = vmatpush1.msra.mxu0 %v606
        %868 = vmatprep.subr.mxu0 %v610
        %869 = vmatpush1.msra.mxu0 %v609
        %870 = vmatprep.subr.mxu0 %v613
        %871 = vmatpush1.msra.mxu0 %v612
        %872 = vmatprep.subr.mxu0 %v616
        %873 = vmatpush1.msra.mxu0 %v615
        %874 = vmatprep.subr.mxu0 %v619
        %875 = vmatpush1.msra.mxu0 %v618
        %876 = vmatprep.subr.mxu0 %v622
        %877 = vmatpush1.msra.mxu0 %v621
        %878 = vmatprep.subr.mxu0 %v625
        %879 = vmatpush1.msra.mxu0 %v624
        %880 = vmatprep.subr.mxu0 %v628
        %881 = vmatpush1.msra.mxu0 %v627
        %882 = vmatprep.subr.mxu0 %v631
        %883 = vmatpush1.msra.mxu0 %v630
        %884 = vmatprep.subr.mxu0 %v634
        %885 = vmatpush1.msra.mxu0 %v633
        %886 = vmatprep.subr.mxu0 %v637
        %887 = vmatpush1.msra.mxu0 %v636
        %888 = vmatprep.subr.mxu0 %v640
        %889 = vmatpush1.msra.mxu0 %v639
        %890 = vmatprep.subr.mxu0 %v643
        %891 = vmatpush1.msra.mxu0 %v642
        %892 = vmatprep.subr.mxu0 %v646
        %893 = vmatpush1.msra.mxu0 %v645
        %894 = vmatprep.subr.mxu0 %v649
        %895 = vmatpush1.msra.mxu0 %v648
        %896 = vmatprep.subr.mxu0 %v652
        %897 = vmatpush1.msra.mxu0 %v651
        %898 = vmatprep.subr.mxu0 %v655
        %899 = vmatpush1.msra.mxu0 %v654
        %900 = vmatprep.subr.mxu0 %v658
        %901 = vmatpush1.msra.mxu0 %v657
        %902 = vmatprep.subr.mxu0 %v661
        %903 = vmatpush1.msra.mxu0 %v660
        %904 = vmatprep.subr.mxu0 %v664
        %905 = vmatpush1.msra.mxu0 %v663
        %906 = vmatprep.subr.mxu0 %v667
        %907 = vmatpush1.msra.mxu0 %v666
        %908 = vmatprep.subr.mxu0 %v670
        %909 = vmatpush1.msra.mxu0 %v669
        %910 = vmatprep.subr.mxu0 %v673
        %911 = vmatpush1.msra.mxu0 %v672
        %912 = vmatprep.subr.mxu0 %v676
        %913 = vmatpush1.msra.mxu0 %v675
        %914 = vmatprep.subr.mxu0 %v679
        %915 = vmatpush1.msra.mxu0 %v678
        %916 = vmatprep.mubr.f32.mxu0 %v386
        %917 = vmatmul.mubr.f32.gmra.mrb[0].mxu0 %v385
        %v918 = vpop.f32.mrb[0].mxu0
        %v919 = vadd.f32 %v842, %v918
        %v920 = vpop.f32.mrb[0].mxu0
        %v921 = vadd.f32 %v844, %v920
        %922 = vmatprep.mubr.f32.mxu0 %v392
        %923 = vmatmul.mubr.f32.gmra.mrb[0].mxu0 %v391
        %v924 = vpop.f32.mrb[0].mxu0
        %v925 = vadd.f32 %v848, %v924
        %v926 = vpop.f32.mrb[0].mxu0
        %v927 = vadd.f32 %v850, %v926
        %928 = vdwg.mxu0
        %929 = vmatprep.subr.mxu0 0.0
        %930 = vmatpush1.msra.mxu0 %v395
        %931 = vmatprep.subr.mxu0 0.0
        %932 = vmatpush1.msra.mxu0 %v398
        %933 = vmatprep.subr.mxu0 0.0
        %934 = vmatpush1.msra.mxu0 %v401
        %935 = vmatprep.subr.mxu0 0.0
        %936 = vmatpush1.msra.mxu0 %v404
        %937 = vmatprep.subr.mxu0 0.0
        %938 = vmatpush1.msra.mxu0 %v407
        %939 = vmatprep.subr.mxu0 0.0
        %940 = vmatpush1.msra.mxu0 %v410
        %941 = vmatprep.subr.mxu0 0.0
        %942 = vmatpush1.msra.mxu0 %v413
        %943 = vmatprep.subr.mxu0 0.0
        %944 = vmatpush1.msra.mxu0 %v416
        %945 = vmatprep.subr.mxu0 0.0
        %946 = vmatpush1.msra.mxu0 %v419
        %947 = vmatprep.subr.mxu0 0.0
        %948 = vmatpush1.msra.mxu0 %v422
        %949 = vmatprep.subr.mxu0 0.0
        %950 = vmatpush1.msra.mxu0 %v425
        %951 = vmatprep.subr.mxu0 0.0
        %952 = vmatpush1.msra.mxu0 %v428
        %953 = vmatprep.subr.mxu0 0.0
        %954 = vmatpush1.msra.mxu0 %v431
        %955 = vmatprep.subr.mxu0 0.0
        %956 = vmatpush1.msra.mxu0 %v434
        %957 = vmatprep.subr.mxu0 0.0
        %958 = vmatpush1.msra.mxu0 %v437
        %959 = vmatprep.subr.mxu0 0.0
        %960 = vmatpush1.msra.mxu0 %v440
        %961 = vmatprep.subr.mxu0 0.0
        %962 = vmatpush1.msra.mxu0 %v443
        %963 = vmatprep.subr.mxu0 0.0
        %964 = vmatpush1.msra.mxu0 %v446
        %965 = vmatprep.subr.mxu0 0.0
        %966 = vmatpush1.msra.mxu0 %v449
        %967 = vmatprep.subr.mxu0 0.0
        %968 = vmatpush1.msra.mxu0 %v452
        %969 = vmatprep.subr.mxu0 0.0
        %970 = vmatpush1.msra.mxu0 %v455
        %971 = vmatprep.subr.mxu0 0.0
        %972 = vmatpush1.msra.mxu0 %v458
        %973 = vmatprep.subr.mxu0 0.0
        %974 = vmatpush1.msra.mxu0 %v461
        %975 = vmatprep.subr.mxu0 0.0
        %976 = vmatpush1.msra.mxu0 %v464
        %977 = vmatprep.subr.mxu0 0.0
        %978 = vmatpush1.msra.mxu0 %v467
        %979 = vmatprep.subr.mxu0 0.0
        %980 = vmatpush1.msra.mxu0 %v470
        %981 = vmatprep.subr.mxu0 0.0
        %982 = vmatpush1.msra.mxu0 %v473
        %983 = vmatprep.subr.mxu0 0.0
        %984 = vmatpush1.msra.mxu0 %v476
        %985 = vmatprep.subr.mxu0 0.0
        %986 = vmatpush1.msra.mxu0 %v479
        %987 = vmatprep.subr.mxu0 0.0
        %988 = vmatpush1.msra.mxu0 %v482
        %989 = vmatprep.subr.mxu0 0.0
        %990 = vmatpush1.msra.mxu0 %v485
        %991 = vmatprep.subr.mxu0 0.0
        %992 = vmatpush1.msra.mxu0 %v488
        %993 = vmatprep.mubr.f32.mxu0 %v382
        %994 = vmatmul.mubr.f32.gmra.mrb[0].mxu0 %v381
        %v995 = vpop.f32.mrb[0].mxu0
        %v996 = vadd.f32 %v694, %v995
        %v997 = vpop.f32.mrb[0].mxu0
        %998 = vmatprep.mubr.f32.mxu0 %v388
        %999 = vmatmul.mubr.f32.gmra.mrb[0].mxu0 %v387
        %v1000 = vpop.f32.mrb[0].mxu0
        %v1001 = vadd.f32 %v694, %v1000
        %v1002 = vpop.f32.mrb[0].mxu0
        %1003 = vdwg.mxu0
        %1004 = vmatprep.subr.mxu0 0.0
        %1005 = vmatpush1.msra.mxu0 %v491
        %1006 = vmatprep.subr.mxu0 0.0
        %1007 = vmatpush1.msra.mxu0 %v494
        %1008 = vmatprep.subr.mxu0 0.0
        %1009 = vmatpush1.msra.mxu0 %v497
        %1010 = vmatprep.subr.mxu0 0.0
        %1011 = vmatpush1.msra.mxu0 %v500
        %1012 = vmatprep.subr.mxu0 0.0
        %1013 = vmatpush1.msra.mxu0 %v503
        %1014 = vmatprep.subr.mxu0 0.0
        %1015 = vmatpush1.msra.mxu0 %v506
        %1016 = vmatprep.subr.mxu0 0.0
        %1017 = vmatpush1.msra.mxu0 %v509
        %1018 = vmatprep.subr.mxu0 0.0
        %1019 = vmatpush1.msra.mxu0 %v512
        %1020 = vmatprep.subr.mxu0 0.0
        %1021 = vmatpush1.msra.mxu0 %v515
        %1022 = vmatprep.subr.mxu0 0.0
        %1023 = vmatpush1.msra.mxu0 %v518
        %1024 = vmatprep.subr.mxu0 0.0
        %1025 = vmatpush1.msra.mxu0 %v521
        %1026 = vmatprep.subr.mxu0 0.0
        %1027 = vmatpush1.msra.mxu0 %v524
        %1028 = vmatprep.subr.mxu0 0.0
        %1029 = vmatpush1.msra.mxu0 %v527
        %1030 = vmatprep.subr.mxu0 0.0
        %1031 = vmatpush1.msra.mxu0 %v530
        %1032 = vmatprep.subr.mxu0 0.0
        %1033 = vmatpush1.msra.mxu0 %v533
        %1034 = vmatprep.subr.mxu0 0.0
        %1035 = vmatpush1.msra.mxu0 %v536
        %1036 = vmatprep.subr.mxu0 0.0
        %1037 = vmatpush1.msra.mxu0 %v539
        %1038 = vmatprep.subr.mxu0 0.0
        %1039 = vmatpush1.msra.mxu0 %v542
        %1040 = vmatprep.subr.mxu0 0.0
        %1041 = vmatpush1.msra.mxu0 %v545
        %1042 = vmatprep.subr.mxu0 0.0
        %1043 = vmatpush1.msra.mxu0 %v548
        %1044 = vmatprep.subr.mxu0 0.0
        %1045 = vmatpush1.msra.mxu0 %v551
        %1046 = vmatprep.subr.mxu0 0.0
        %1047 = vmatpush1.msra.mxu0 %v554
        %1048 = vmatprep.subr.mxu0 0.0
        %1049 = vmatpush1.msra.mxu0 %v557
        %1050 = vmatprep.subr.mxu0 0.0
        %1051 = vmatpush1.msra.mxu0 %v560
        %1052 = vmatprep.subr.mxu0 0.0
        %1053 = vmatpush1.msra.mxu0 %v563
        %1054 = vmatprep.subr.mxu0 0.0
        %1055 = vmatpush1.msra.mxu0 %v566
        %1056 = vmatprep.subr.mxu0 0.0
        %1057 = vmatpush1.msra.mxu0 %v569
        %1058 = vmatprep.subr.mxu0 0.0
        %1059 = vmatpush1.msra.mxu0 %v572
        %1060 = vmatprep.subr.mxu0 0.0
        %1061 = vmatpush1.msra.mxu0 %v575
        %1062 = vmatprep.subr.mxu0 0.0
        %1063 = vmatpush1.msra.mxu0 %v578
        %1064 = vmatprep.subr.mxu0 0.0
        %1065 = vmatpush1.msra.mxu0 %v581
        %1066 = vmatprep.subr.mxu0 0.0
        %1067 = vmatpush1.msra.mxu0 %v584
        %1068 = vmatprep.mubr.f32.mxu0 %v384
        %1069 = vmatmul.mubr.f32.gmra.mrb[0].mxu0 %v383
        %v1070 = vpop.f32.mrb[0].mxu0
        %v1071 = vadd.f32 %v996, %v1070
        %v1072 = vpop.f32.mrb[0].mxu0
        %1073 = vmatprep.mubr.f32.mxu0 %v390
        %1074 = vmatmul.mubr.f32.gmra.mrb[0].mxu0 %v389
        %v1075 = vpop.f32.mrb[0].mxu0
        %v1076 = vadd.f32 %v1001, %v1075
        %v1077 = vpop.f32.mrb[0].mxu0
        %1078 = vdwg.mxu0
        %1079 = vmatprep.subr.mxu0 0.0
        %1080 = vmatpush1.msra.mxu0 %v587
        %1081 = vmatprep.subr.mxu0 0.0
        %1082 = vmatpush1.msra.mxu0 %v590
        %1083 = vmatprep.subr.mxu0 0.0
        %1084 = vmatpush1.msra.mxu0 %v593
        %1085 = vmatprep.subr.mxu0 0.0
        %1086 = vmatpush1.msra.mxu0 %v596
        %1087 = vmatprep.subr.mxu0 0.0
        %1088 = vmatpush1.msra.mxu0 %v599
        %1089 = vmatprep.subr.mxu0 0.0
        %1090 = vmatpush1.msra.mxu0 %v602
        %1091 = vmatprep.subr.mxu0 0.0
        %1092 = vmatpush1.msra.mxu0 %v605
        %1093 = vmatprep.subr.mxu0 0.0
        %1094 = vmatpush1.msra.mxu0 %v608
        %1095 = vmatprep.subr.mxu0 0.0
        %1096 = vmatpush1.msra.mxu0 %v611
        %1097 = vmatprep.subr.mxu0 0.0
        %1098 = vmatpush1.msra.mxu0 %v614
        %1099 = vmatprep.subr.mxu0 0.0
        %1100 = vmatpush1.msra.mxu0 %v617
        %1101 = vmatprep.subr.mxu0 0.0
        %1102 = vmatpush1.msra.mxu0 %v620
        %1103 = vmatprep.subr.mxu0 0.0
        %1104 = vmatpush1.msra.mxu0 %v623
        %1105 = vmatprep.subr.mxu0 0.0
        %1106 = vmatpush1.msra.mxu0 %v626
        %1107 = vmatprep.subr.mxu0 0.0
        %1108 = vmatpush1.msra.mxu0 %v629
        %1109 = vmatprep.subr.mxu0 0.0
        %1110 = vmatpush1.msra.mxu0 %v632
        %1111 = vmatprep.subr.mxu0 0.0
        %1112 = vmatpush1.msra.mxu0 %v635
        %1113 = vmatprep.subr.mxu0 0.0
        %1114 = vmatpush1.msra.mxu0 %v638
        %1115 = vmatprep.subr.mxu0 0.0
        %1116 = vmatpush1.msra.mxu0 %v641
        %1117 = vmatprep.subr.mxu0 0.0
        %1118 = vmatpush1.msra.mxu0 %v644
        %1119 = vmatprep.subr.mxu0 0.0
        %1120 = vmatpush1.msra.mxu0 %v647
        %1121 = vmatprep.subr.mxu0 0.0
        %1122 = vmatpush1.msra.mxu0 %v650
        %1123 = vmatprep.subr.mxu0 0.0
        %1124 = vmatpush1.msra.mxu0 %v653
        %1125 = vmatprep.subr.mxu0 0.0
        %1126 = vmatpush1.msra.mxu0 %v656
        %1127 = vmatprep.subr.mxu0 0.0
        %1128 = vmatpush1.msra.mxu0 %v659
        %1129 = vmatprep.subr.mxu0 0.0
        %1130 = vmatpush1.msra.mxu0 %v662
        %1131 = vmatprep.subr.mxu0 0.0
        %1132 = vmatpush1.msra.mxu0 %v665
        %1133 = vmatprep.subr.mxu0 0.0
        %1134 = vmatpush1.msra.mxu0 %v668
        %1135 = vmatprep.subr.mxu0 0.0
        %1136 = vmatpush1.msra.mxu0 %v671
        %1137 = vmatprep.subr.mxu0 0.0
        %1138 = vmatpush1.msra.mxu0 %v674
        %1139 = vmatprep.subr.mxu0 0.0
        %1140 = vmatpush1.msra.mxu0 %v677
        %1141 = vmatprep.subr.mxu0 0.0
        %1142 = vmatpush1.msra.mxu0 %v680
        %1143 = vmatprep.mubr.f32.mxu0 %v386
        %1144 = vmatmul.mubr.f32.gmra.mrb[0].mxu0 %v385
        %v1145 = vpop.f32.mrb[0].mxu0
        %v1146 = vadd.f32 %v1071, %v1145
        %v1147 = vpop.f32.mrb[0].mxu0
        %1148 = vmatprep.mubr.f32.mxu0 %v392
        %1149 = vmatmul.mubr.f32.gmra.mrb[0].mxu0 %v391
        %v1150 = vpop.f32.mrb[0].mxu0
        %v1151 = vadd.f32 %v1076, %v1150
        %v1152 = vpop.f32.mrb[0].mxu0
        %1153 = vdwg.mxu0
        %v1154 = vmax.f32 %v919, 0.0
        %v1155 = vmax.f32 %v921, 0.0
        %v1156 = vmax.f32 %v1146, 0.0
        %v1157 = vmax.f32 %v925, 0.0
        %v1158 = vmax.f32 %v927, 0.0
        %v1159 = vmax.f32 %v1151, 0.0
        %v1160 = vld [vmem:[#allocation7] sm:$0xff]
        %v1161 = vld [vmem:[#allocation7 + $0x8] sm:$0xff]
        %v1162 = vld [vmem:[#allocation7 + $0x10] sm:$0xff]
        %v1163 = vld [vmem:[#allocation7 + $0x18] sm:$0xff]
        %v1164 = vld [vmem:[#allocation7 + $0x20] sm:$0xff]
        %v1165 = vld [vmem:[#allocation7 + $0x28] sm:$0xff]
        %v1166 = vld [vmem:[#allocation7 + $0x30] sm:$0xff]
        %v1167 = vld [vmem:[#allocation7 + $0x38] sm:$0xff]
        %v1168 = vld [vmem:[#allocation7 + $0x40] sm:$0xff]
        %v1169 = vld [vmem:[#allocation7 + $0x48] sm:$0xff]
        %v1170 = vld [vmem:[#allocation7 + $0x50] sm:$0xff]
        %v1171 = vld [vmem:[#allocation7 + $0x58] sm:$0xff]
        %v1172 = vld [vmem:[#allocation7 + $0x60] sm:$0xff]
        %v1173 = vld [vmem:[#allocation7 + $0x68] sm:$0xff]
        %v1174 = vld [vmem:[#allocation7 + $0x70] sm:$0xff]
        %v1175 = vld [vmem:[#allocation7 + $0x78] sm:$0xff]
        %v1176 = vld [vmem:[#allocation7 + $0x80] sm:$0xff]
        %v1177 = vld [vmem:[#allocation7 + $0x88] sm:$0xff]
        %v1178 = vld [vmem:[#allocation7 + $0x90] sm:$0xff]
        %v1179 = vld [vmem:[#allocation7 + $0x98] sm:$0xff]
        %v1180 = vld [vmem:[#allocation7 + $0xa0] sm:$0xff]
        %v1181 = vld [vmem:[#allocation7 + $0xa8] sm:$0xff]
        %v1182 = vld [vmem:[#allocation7 + $0xb0] sm:$0xff]
        %v1183 = vld [vmem:[#allocation7 + $0xb8] sm:$0xff]
        %v1184 = vld [vmem:[#allocation7 + $0xc0] sm:$0xff]
        %v1185 = vld [vmem:[#allocation7 + $0xc8] sm:$0xff]
        %v1186 = vld [vmem:[#allocation7 + $0xd0] sm:$0xff]
        %v1187 = vld [vmem:[#allocation7 + $0xd8] sm:$0xff]
        %v1188 = vld [vmem:[#allocation7 + $0xe0] sm:$0xff]
        %v1189 = vld [vmem:[#allocation7 + $0xe8] sm:$0xff]
        %v1190 = vld [vmem:[#allocation7 + $0xf0] sm:$0xff]
        %v1191 = vld [vmem:[#allocation7 + $0xf8] sm:$0xff]
        %v1192 = vld [vmem:[#allocation7 + $0x100] sm:$0xff]
        %v1193 = vld [vmem:[#allocation7 + $0x108] sm:$0xff]
        %v1194 = vld [vmem:[#allocation7 + $0x110] sm:$0xff]
        %v1195 = vld [vmem:[#allocation7 + $0x118] sm:$0xff]
        %v1196 = vld [vmem:[#allocation7 + $0x120] sm:$0xff]
        %v1197 = vld [vmem:[#allocation7 + $0x128] sm:$0xff]
        %v1198 = vld [vmem:[#allocation7 + $0x130] sm:$0xff]
        %v1199 = vld [vmem:[#allocation7 + $0x138] sm:$0xff]
        %v1200 = vld [vmem:[#allocation7 + $0x140] sm:$0xff]
        %v1201 = vld [vmem:[#allocation7 + $0x148] sm:$0xff]
        %v1202 = vld [vmem:[#allocation7 + $0x150] sm:$0xff]
        %v1203 = vld [vmem:[#allocation7 + $0x158] sm:$0xff]
        %v1204 = vld [vmem:[#allocation7 + $0x160] sm:$0xff]
        %v1205 = vld [vmem:[#allocation7 + $0x168] sm:$0xff]
        %v1206 = vld [vmem:[#allocation7 + $0x170] sm:$0xff]
        %v1207 = vld [vmem:[#allocation7 + $0x178] sm:$0xff]
        %v1208 = vld [vmem:[#allocation7 + $0x180] sm:$0xff]
        %v1209 = vld [vmem:[#allocation7 + $0x188] sm:$0xff]
        %v1210 = vld [vmem:[#allocation7 + $0x190] sm:$0xff]
        %v1211 = vld [vmem:[#allocation7 + $0x198] sm:$0xff]
        %v1212 = vld [vmem:[#allocation7 + $0x1a0] sm:$0xff]
        %v1213 = vld [vmem:[#allocation7 + $0x1a8] sm:$0xff]
        %v1214 = vld [vmem:[#allocation7 + $0x1b0] sm:$0xff]
        %v1215 = vld [vmem:[#allocation7 + $0x1b8] sm:$0xff]
        %v1216 = vld [vmem:[#allocation7 + $0x1c0] sm:$0xff]
        %v1217 = vld [vmem:[#allocation7 + $0x1c8] sm:$0xff]
        %v1218 = vld [vmem:[#allocation7 + $0x1d0] sm:$0xff]
        %v1219 = vld [vmem:[#allocation7 + $0x1d8] sm:$0xff]
        %v1220 = vld [vmem:[#allocation7 + $0x1e0] sm:$0xff]
        %v1221 = vld [vmem:[#allocation7 + $0x1e8] sm:$0xff]
        %v1222 = vld [vmem:[#allocation7 + $0x1f0] sm:$0xff]
        %v1223 = vld [vmem:[#allocation7 + $0x1f8] sm:$0xff]
        %v1224 = vld [vmem:[#allocation7 + $0x200] sm:$0xff]
        %v1225 = vld [vmem:[#allocation7 + $0x208] sm:$0xff]
        %v1226 = vld [vmem:[#allocation7 + $0x210] sm:$0xff]
        %v1227 = vld [vmem:[#allocation7 + $0x218] sm:$0xff]
        %v1228 = vld [vmem:[#allocation7 + $0x220] sm:$0xff]
        %v1229 = vld [vmem:[#allocation7 + $0x228] sm:$0xff]
        %v1230 = vld [vmem:[#allocation7 + $0x230] sm:$0xff]
        %v1231 = vld [vmem:[#allocation7 + $0x238] sm:$0xff]
        %v1232 = vld [vmem:[#allocation7 + $0x240] sm:$0xff]
        %v1233 = vld [vmem:[#allocation7 + $0x248] sm:$0xff]
        %v1234 = vld [vmem:[#allocation7 + $0x250] sm:$0xff]
        %v1235 = vld [vmem:[#allocation7 + $0x258] sm:$0xff]
        %v1236 = vld [vmem:[#allocation7 + $0x260] sm:$0xff]
        %v1237 = vld [vmem:[#allocation7 + $0x268] sm:$0xff]
        %v1238 = vld [vmem:[#allocation7 + $0x270] sm:$0xff]
        %v1239 = vld [vmem:[#allocation7 + $0x278] sm:$0xff]
        %v1240 = vld [vmem:[#allocation7 + $0x280] sm:$0xff]
        %v1241 = vld [vmem:[#allocation7 + $0x288] sm:$0xff]
        %v1242 = vld [vmem:[#allocation7 + $0x290] sm:$0xff]
        %v1243 = vld [vmem:[#allocation7 + $0x298] sm:$0xff]
        %v1244 = vld [vmem:[#allocation7 + $0x2a0] sm:$0xff]
        %v1245 = vld [vmem:[#allocation7 + $0x2a8] sm:$0xff]
        %v1246 = vld [vmem:[#allocation7 + $0x2b0] sm:$0xff]
        %v1247 = vld [vmem:[#allocation7 + $0x2b8] sm:$0xff]
        %v1248 = vld [vmem:[#allocation7 + $0x2c0] sm:$0xff]
        %v1249 = vld [vmem:[#allocation7 + $0x2c8] sm:$0xff]
        %v1250 = vld [vmem:[#allocation7 + $0x2d0] sm:$0xff]
        %v1251 = vld [vmem:[#allocation7 + $0x2d8] sm:$0xff]
        %v1252 = vld [vmem:[#allocation7 + $0x2e0] sm:$0xff]
        %v1253 = vld [vmem:[#allocation7 + $0x2e8] sm:$0xff]
        %v1254 = vld [vmem:[#allocation7 + $0x2f0] sm:$0xff]
        %v1255 = vld [vmem:[#allocation7 + $0x2f8] sm:$0xff]
        %v1256 = vld [vmem:[#allocation7 + $0x300] sm:$0xff]
        %v1257 = vld [vmem:[#allocation7 + $0x308] sm:$0xff]
        %v1258 = vld [vmem:[#allocation7 + $0x310] sm:$0xff]
        %v1259 = vld [vmem:[#allocation7 + $0x318] sm:$0xff]
        %v1260 = vld [vmem:[#allocation7 + $0x320] sm:$0xff]
        %v1261 = vld [vmem:[#allocation7 + $0x328] sm:$0xff]
        %v1262 = vld [vmem:[#allocation7 + $0x330] sm:$0xff]
        %v1263 = vld [vmem:[#allocation7 + $0x338] sm:$0xff]
        %v1264 = vld [vmem:[#allocation7 + $0x340] sm:$0xff]
        %v1265 = vld [vmem:[#allocation7 + $0x348] sm:$0xff]
        %v1266 = vld [vmem:[#allocation7 + $0x350] sm:$0xff]
        %v1267 = vld [vmem:[#allocation7 + $0x358] sm:$0xff]
        %v1268 = vld [vmem:[#allocation7 + $0x360] sm:$0xff]
        %v1269 = vld [vmem:[#allocation7 + $0x368] sm:$0xff]
        %v1270 = vld [vmem:[#allocation7 + $0x370] sm:$0xff]
        %v1271 = vld [vmem:[#allocation7 + $0x378] sm:$0xff]
        %v1272 = vld [vmem:[#allocation7 + $0x380] sm:$0xff]
        %v1273 = vld [vmem:[#allocation7 + $0x388] sm:$0xff]
        %v1274 = vld [vmem:[#allocation7 + $0x390] sm:$0xff]
        %v1275 = vld [vmem:[#allocation7 + $0x398] sm:$0xff]
        %v1276 = vld [vmem:[#allocation7 + $0x3a0] sm:$0xff]
        %v1277 = vld [vmem:[#allocation7 + $0x3a8] sm:$0xff]
        %v1278 = vld [vmem:[#allocation7 + $0x3b0] sm:$0xff]
        %v1279 = vld [vmem:[#allocation7 + $0x3b8] sm:$0xff]
        %v1280 = vld [vmem:[#allocation7 + $0x3c0] sm:$0xff]
        %v1281 = vld [vmem:[#allocation7 + $0x3c8] sm:$0xff]
        %v1282 = vld [vmem:[#allocation7 + $0x3d0] sm:$0xff]
        %v1283 = vld [vmem:[#allocation7 + $0x3d8] sm:$0xff]
        %v1284 = vld [vmem:[#allocation7 + $0x3e0] sm:$0xff]
        %v1285 = vld [vmem:[#allocation7 + $0x3e8] sm:$0xff]
        %v1286 = vld [vmem:[#allocation7 + $0x3f0] sm:$0xff]
        %v1287 = vld [vmem:[#allocation7 + $0x3f8] sm:$0xff]
        %v1288 = vld [vmem:[#allocation7 + $0x400] sm:$0xff]
        %v1289 = vld [vmem:[#allocation7 + $0x408] sm:$0xff]
        %v1290 = vld [vmem:[#allocation7 + $0x410] sm:$0xff]
        %v1291 = vld [vmem:[#allocation7 + $0x418] sm:$0xff]
        %v1292 = vld [vmem:[#allocation7 + $0x420] sm:$0xff]
        %v1293 = vld [vmem:[#allocation7 + $0x428] sm:$0xff]
        %v1294 = vld [vmem:[#allocation7 + $0x430] sm:$0xff]
        %v1295 = vld [vmem:[#allocation7 + $0x438] sm:$0xff]
        %v1296 = vld [vmem:[#allocation7 + $0x440] sm:$0xff]
        %v1297 = vld [vmem:[#allocation7 + $0x448] sm:$0xff]
        %v1298 = vld [vmem:[#allocation7 + $0x450] sm:$0xff]
        %v1299 = vld [vmem:[#allocation7 + $0x458] sm:$0xff]
        %v1300 = vld [vmem:[#allocation7 + $0x460] sm:$0xff]
        %v1301 = vld [vmem:[#allocation7 + $0x468] sm:$0xff]
        %v1302 = vld [vmem:[#allocation7 + $0x470] sm:$0xff]
        %v1303 = vld [vmem:[#allocation7 + $0x478] sm:$0xff]
        %v1304 = vld [vmem:[#allocation11] sm:$0x7]
        %v1306 = vlaneseq
        %v1307 = vshrl.u32 %v1306, 7
        %v1308 = vsub.s32 0, %v1307
        %v1309 = vrot.slane %v1304, %v1308
        %v1310 = vlaneseq
        %v1311 = vshrl.u32 %v1310, 7
        %v1312 = vsub.s32 1, %v1311
        %v1313 = vrot.slane %v1304, %v1312
        %v1314 = vlaneseq
        %v1315 = vshrl.u32 %v1314, 7
        %v1316 = vsub.s32 2, %v1315
        %v1317 = vrot.slane %v1304, %v1316
        %1321 = vmatprep.subr.mxu0 %v1161
        %1322 = vmatpush1.msra.mxu0 %v1160
        %1323 = vmatprep.subr.mxu0 %v1164
        %1324 = vmatpush1.msra.mxu0 %v1163
        %1325 = vmatprep.subr.mxu0 %v1167
        %1326 = vmatpush1.msra.mxu0 %v1166
        %1327 = vmatprep.subr.mxu0 %v1170
        %1328 = vmatpush1.msra.mxu0 %v1169
        %1329 = vmatprep.subr.mxu0 %v1173
        %1330 = vmatpush1.msra.mxu0 %v1172
        %1331 = vmatprep.subr.mxu0 %v1176
        %1332 = vmatpush1.msra.mxu0 %v1175
        %1333 = vmatprep.subr.mxu0 %v1179
        %1334 = vmatpush1.msra.mxu0 %v1178
        %1335 = vmatprep.subr.mxu0 %v1182
        %1336 = vmatpush1.msra.mxu0 %v1181
        %1337 = vmatprep.subr.mxu0 %v1185
        %1338 = vmatpush1.msra.mxu0 %v1184
        %1339 = vmatprep.subr.mxu0 %v1188
        %1340 = vmatpush1.msra.mxu0 %v1187
        %1341 = vmatprep.subr.mxu0 %v1191
        %1342 = vmatpush1.msra.mxu0 %v1190
        %1343 = vmatprep.subr.mxu0 %v1194
        %1344 = vmatpush1.msra.mxu0 %v1193
        %1345 = vmatprep.subr.mxu0 %v1197
        %1346 = vmatpush1.msra.mxu0 %v1196
        %1347 = vmatprep.subr.mxu0 %v1200
        %1348 = vmatpush1.msra.mxu0 %v1199
        %1349 = vmatprep.subr.mxu0 %v1203
        %1350 = vmatpush1.msra.mxu0 %v1202
        %1351 = vmatprep.subr.mxu0 %v1206
        %1352 = vmatpush1.msra.mxu0 %v1205
        %1353 = vmatprep.subr.mxu0 %v1209
        %1354 = vmatpush1.msra.mxu0 %v1208
        %1355 = vmatprep.subr.mxu0 %v1212
        %1356 = vmatpush1.msra.mxu0 %v1211
        %1357 = vmatprep.subr.mxu0 %v1215
        %1358 = vmatpush1.msra.mxu0 %v1214
        %1359 = vmatprep.subr.mxu0 %v1218
        %1360 = vmatpush1.msra.mxu0 %v1217
        %1361 = vmatprep.subr.mxu0 %v1221
        %1362 = vmatpush1.msra.mxu0 %v1220
        %1363 = vmatprep.subr.mxu0 %v1224
        %1364 = vmatpush1.msra.mxu0 %v1223
        %1365 = vmatprep.subr.mxu0 %v1227
        %1366 = vmatpush1.msra.mxu0 %v1226
        %1367 = vmatprep.subr.mxu0 %v1230
        %1368 = vmatpush1.msra.mxu0 %v1229
        %1369 = vmatprep.subr.mxu0 %v1233
        %1370 = vmatpush1.msra.mxu0 %v1232
        %1371 = vmatprep.subr.mxu0 %v1236
        %1372 = vmatpush1.msra.mxu0 %v1235
        %1373 = vmatprep.subr.mxu0 %v1239
        %1374 = vmatpush1.msra.mxu0 %v1238
        %1375 = vmatprep.subr.mxu0 %v1242
        %1376 = vmatpush1.msra.mxu0 %v1241
        %1377 = vmatprep.subr.mxu0 %v1245
        %1378 = vmatpush1.msra.mxu0 %v1244
        %1379 = vmatprep.subr.mxu0 %v1248
        %1380 = vmatpush1.msra.mxu0 %v1247
        %1381 = vmatprep.subr.mxu0 %v1251
        %1382 = vmatpush1.msra.mxu0 %v1250
        %1383 = vmatprep.subr.mxu0 %v1254
        %1384 = vmatpush1.msra.mxu0 %v1253
        %1385 = vmatprep.mubr.f32.mxu0 %v1155
        %1386 = vmatmul.mubr.f32.gmra.mrb[0].mxu0 %v1154
        %v1387 = vpop.f32.mrb[0].mxu0
        %v1388 = vadd.f32 %v1309, %v1387
        %v1389 = vpop.f32.mrb[0].mxu0
        %v1390 = vadd.f32 %v1313, %v1389
        %1391 = vmatprep.mubr.f32.mxu0 %v1158
        %1392 = vmatmul.mubr.f32.gmra.mrb[0].mxu0 %v1157
        %v1393 = vpop.f32.mrb[0].mxu0
        %v1394 = vadd.f32 %v1309, %v1393
        %v1395 = vpop.f32.mrb[0].mxu0
        %v1396 = vadd.f32 %v1313, %v1395
        %1397 = vdwg.mxu0
        %1398 = vmatprep.subr.mxu0 %v1257
        %1399 = vmatpush1.msra.mxu0 %v1256
        %1400 = vmatprep.subr.mxu0 %v1260
        %1401 = vmatpush1.msra.mxu0 %v1259
        %1402 = vmatprep.subr.mxu0 %v1263
        %1403 = vmatpush1.msra.mxu0 %v1262
        %1404 = vmatprep.subr.mxu0 %v1266
        %1405 = vmatpush1.msra.mxu0 %v1265
        %1406 = vmatprep.subr.mxu0 %v1269
        %1407 = vmatpush1.msra.mxu0 %v1268
        %1408 = vmatprep.subr.mxu0 %v1272
        %1409 = vmatpush1.msra.mxu0 %v1271
        %1410 = vmatprep.subr.mxu0 %v1275
        %1411 = vmatpush1.msra.mxu0 %v1274
        %1412 = vmatprep.subr.mxu0 %v1278
        %1413 = vmatpush1.msra.mxu0 %v1277
        %1414 = vmatprep.subr.mxu0 %v1281
        %1415 = vmatpush1.msra.mxu0 %v1280
        %1416 = vmatprep.subr.mxu0 %v1284
        %1417 = vmatpush1.msra.mxu0 %v1283
        %1418 = vmatprep.subr.mxu0 %v1287
        %1419 = vmatpush1.msra.mxu0 %v1286
        %1420 = vmatprep.subr.mxu0 %v1290
        %1421 = vmatpush1.msra.mxu0 %v1289
        %1422 = vmatprep.subr.mxu0 %v1293
        %1423 = vmatpush1.msra.mxu0 %v1292
        %1424 = vmatprep.subr.mxu0 %v1296
        %1425 = vmatpush1.msra.mxu0 %v1295
        %1426 = vmatprep.subr.mxu0 %v1299
        %1427 = vmatpush1.msra.mxu0 %v1298
        %1428 = vmatprep.subr.mxu0 %v1302
        %1429 = vmatpush1.msra.mxu0 %v1301
        %1430 = vmatprep.subr.mxu0 0.0
        %1431 = vmatpush1.msra.mxu0 0.0
        %1432 = vmatprep.subr.mxu0 0.0
        %1433 = vmatpush1.msra.mxu0 0.0
        %1434 = vmatprep.subr.mxu0 0.0
        %1435 = vmatpush1.msra.mxu0 0.0
        %1436 = vmatprep.subr.mxu0 0.0
        %1437 = vmatpush1.msra.mxu0 0.0
        %1438 = vmatprep.subr.mxu0 0.0
        %1439 = vmatpush1.msra.mxu0 0.0
        %1440 = vmatprep.subr.mxu0 0.0
        %1441 = vmatpush1.msra.mxu0 0.0
        %1442 = vmatprep.subr.mxu0 0.0
        %1443 = vmatpush1.msra.mxu0 0.0
        %1444 = vmatprep.subr.mxu0 0.0
        %1445 = vmatpush1.msra.mxu0 0.0
        %1446 = vmatprep.subr.mxu0 0.0
        %1447 = vmatpush1.msra.mxu0 0.0
        %1448 = vmatprep.subr.mxu0 0.0
        %1449 = vmatpush1.msra.mxu0 0.0
        %1450 = vmatprep.subr.mxu0 0.0
        %1451 = vmatpush1.msra.mxu0 0.0
        %1452 = vmatprep.subr.mxu0 0.0
        %1453 = vmatpush1.msra.mxu0 0.0
        %1454 = vmatprep.subr.mxu0 0.0
        %1455 = vmatpush1.msra.mxu0 0.0
        %1456 = vmatprep.subr.mxu0 0.0
        %1457 = vmatpush1.msra.mxu0 0.0
        %1458 = vmatprep.subr.mxu0 0.0
        %1459 = vmatpush1.msra.mxu0 0.0
        %1460 = vmatprep.subr.mxu0 0.0
        %1461 = vmatpush1.msra.mxu0 0.0
        %1462 = vmatprep.mubr.f32.mxu0 0.0
        %1463 = vmatmul.mubr.f32.gmra.mrb[0].mxu0 %v1156
        %v1464 = vpop.f32.mrb[0].mxu0
        %v1465 = vadd.f32 %v1388, %v1464
        %v1466 = vpop.f32.mrb[0].mxu0
        %v1467 = vadd.f32 %v1390, %v1466
        %1468 = vmatprep.mubr.f32.mxu0 0.0
        %1469 = vmatmul.mubr.f32.gmra.mrb[0].mxu0 %v1159
        %v1470 = vpop.f32.mrb[0].mxu0
        %v1471 = vadd.f32 %v1394, %v1470
        %v1472 = vpop.f32.mrb[0].mxu0
        %v1473 = vadd.f32 %v1396, %v1472
        %1474 = vdwg.mxu0
        %1475 = vmatprep.subr.mxu0 0.0
        %1476 = vmatpush1.msra.mxu0 %v1162
        %1477 = vmatprep.subr.mxu0 0.0
        %1478 = vmatpush1.msra.mxu0 %v1165
        %1479 = vmatprep.subr.mxu0 0.0
        %1480 = vmatpush1.msra.mxu0 %v1168
        %1481 = vmatprep.subr.mxu0 0.0
        %1482 = vmatpush1.msra.mxu0 %v1171
        %1483 = vmatprep.subr.mxu0 0.0
        %1484 = vmatpush1.msra.mxu0 %v1174
        %1485 = vmatprep.subr.mxu0 0.0
        %1486 = vmatpush1.msra.mxu0 %v1177
        %1487 = vmatprep.subr.mxu0 0.0
        %1488 = vmatpush1.msra.mxu0 %v1180
        %1489 = vmatprep.subr.mxu0 0.0
        %1490 = vmatpush1.msra.mxu0 %v1183
        %1491 = vmatprep.subr.mxu0 0.0
        %1492 = vmatpush1.msra.mxu0 %v1186
        %1493 = vmatprep.subr.mxu0 0.0
        %1494 = vmatpush1.msra.mxu0 %v1189
        %1495 = vmatprep.subr.mxu0 0.0
        %1496 = vmatpush1.msra.mxu0 %v1192
        %1497 = vmatprep.subr.mxu0 0.0
        %1498 = vmatpush1.msra.mxu0 %v1195
        %1499 = vmatprep.subr.mxu0 0.0
        %1500 = vmatpush1.msra.mxu0 %v1198
        %1501 = vmatprep.subr.mxu0 0.0
        %1502 = vmatpush1.msra.mxu0 %v1201
        %1503 = vmatprep.subr.mxu0 0.0
        %1504 = vmatpush1.msra.mxu0 %v1204
        %1505 = vmatprep.subr.mxu0 0.0
        %1506 = vmatpush1.msra.mxu0 %v1207
        %1507 = vmatprep.subr.mxu0 0.0
        %1508 = vmatpush1.msra.mxu0 %v1210
        %1509 = vmatprep.subr.mxu0 0.0
        %1510 = vmatpush1.msra.mxu0 %v1213
        %1511 = vmatprep.subr.mxu0 0.0
        %1512 = vmatpush1.msra.mxu0 %v1216
        %1513 = vmatprep.subr.mxu0 0.0
        %1514 = vmatpush1.msra.mxu0 %v1219
        %1515 = vmatprep.subr.mxu0 0.0
        %1516 = vmatpush1.msra.mxu0 %v1222
        %1517 = vmatprep.subr.mxu0 0.0
        %1518 = vmatpush1.msra.mxu0 %v1225
        %1519 = vmatprep.subr.mxu0 0.0
        %1520 = vmatpush1.msra.mxu0 %v1228
        %1521 = vmatprep.subr.mxu0 0.0
        %1522 = vmatpush1.msra.mxu0 %v1231
        %1523 = vmatprep.subr.mxu0 0.0
        %1524 = vmatpush1.msra.mxu0 %v1234
        %1525 = vmatprep.subr.mxu0 0.0
        %1526 = vmatpush1.msra.mxu0 %v1237
        %1527 = vmatprep.subr.mxu0 0.0
        %1528 = vmatpush1.msra.mxu0 %v1240
        %1529 = vmatprep.subr.mxu0 0.0
        %1530 = vmatpush1.msra.mxu0 %v1243
        %1531 = vmatprep.subr.mxu0 0.0
        %1532 = vmatpush1.msra.mxu0 %v1246
        %1533 = vmatprep.subr.mxu0 0.0
        %1534 = vmatpush1.msra.mxu0 %v1249
        %1535 = vmatprep.subr.mxu0 0.0
        %1536 = vmatpush1.msra.mxu0 %v1252
        %1537 = vmatprep.subr.mxu0 0.0
        %1538 = vmatpush1.msra.mxu0 %v1255
        %1539 = vmatprep.mubr.f32.mxu0 %v1155
        %1540 = vmatmul.mubr.f32.gmra.mrb[0].mxu0 %v1154
        %v1541 = vpop.f32.mrb[0].mxu0
        %v1542 = vadd.f32 %v1317, %v1541
        %v1543 = vpop.f32.mrb[0].mxu0
        %1544 = vmatprep.mubr.f32.mxu0 %v1158
        %1545 = vmatmul.mubr.f32.gmra.mrb[0].mxu0 %v1157
        %v1546 = vpop.f32.mrb[0].mxu0
        %v1547 = vadd.f32 %v1317, %v1546
        %v1548 = vpop.f32.mrb[0].mxu0
        %1549 = vdwg.mxu0
        %1550 = vmatprep.subr.mxu0 0.0
        %1551 = vmatpush1.msra.mxu0 %v1258
        %1552 = vmatprep.subr.mxu0 0.0
        %1553 = vmatpush1.msra.mxu0 %v1261
        %1554 = vmatprep.subr.mxu0 0.0
        %1555 = vmatpush1.msra.mxu0 %v1264
        %1556 = vmatprep.subr.mxu0 0.0
        %1557 = vmatpush1.msra.mxu0 %v1267
        %1558 = vmatprep.subr.mxu0 0.0
        %1559 = vmatpush1.msra.mxu0 %v1270
        %1560 = vmatprep.subr.mxu0 0.0
        %1561 = vmatpush1.msra.mxu0 %v1273
        %1562 = vmatprep.subr.mxu0 0.0
        %1563 = vmatpush1.msra.mxu0 %v1276
        %1564 = vmatprep.subr.mxu0 0.0
        %1565 = vmatpush1.msra.mxu0 %v1279
        %1566 = vmatprep.subr.mxu0 0.0
        %1567 = vmatpush1.msra.mxu0 %v1282
        %1568 = vmatprep.subr.mxu0 0.0
        %1569 = vmatpush1.msra.mxu0 %v1285
        %1570 = vmatprep.subr.mxu0 0.0
        %1571 = vmatpush1.msra.mxu0 %v1288
        %1572 = vmatprep.subr.mxu0 0.0
        %1573 = vmatpush1.msra.mxu0 %v1291
        %1574 = vmatprep.subr.mxu0 0.0
        %1575 = vmatpush1.msra.mxu0 %v1294
        %1576 = vmatprep.subr.mxu0 0.0
        %1577 = vmatpush1.msra.mxu0 %v1297
        %1578 = vmatprep.subr.mxu0 0.0
        %1579 = vmatpush1.msra.mxu0 %v1300
        %1580 = vmatprep.subr.mxu0 0.0
        %1581 = vmatpush1.msra.mxu0 %v1303
        %1582 = vmatprep.subr.mxu0 0.0
        %1583 = vmatpush1.msra.mxu0 0.0
        %1584 = vmatprep.subr.mxu0 0.0
        %1585 = vmatpush1.msra.mxu0 0.0
        %1586 = vmatprep.subr.mxu0 0.0
        %1587 = vmatpush1.msra.mxu0 0.0
        %1588 = vmatprep.subr.mxu0 0.0
        %1589 = vmatpush1.msra.mxu0 0.0
        %1590 = vmatprep.subr.mxu0 0.0
        %1591 = vmatpush1.msra.mxu0 0.0
        %1592 = vmatprep.subr.mxu0 0.0
        %1593 = vmatpush1.msra.mxu0 0.0
        %1594 = vmatprep.subr.mxu0 0.0
        %1595 = vmatpush1.msra.mxu0 0.0
        %1596 = vmatprep.subr.mxu0 0.0
        %1597 = vmatpush1.msra.mxu0 0.0
        %1598 = vmatprep.subr.mxu0 0.0
        %1599 = vmatpush1.msra.mxu0 0.0
        %1600 = vmatprep.subr.mxu0 0.0
        %1601 = vmatpush1.msra.mxu0 0.0
        %1602 = vmatprep.subr.mxu0 0.0
        %1603 = vmatpush1.msra.mxu0 0.0
        %1604 = vmatprep.subr.mxu0 0.0
        %1605 = vmatpush1.msra.mxu0 0.0
        %1606 = vmatprep.subr.mxu0 0.0
        %1607 = vmatpush1.msra.mxu0 0.0
        %1608 = vmatprep.subr.mxu0 0.0
        %1609 = vmatpush1.msra.mxu0 0.0
        %1610 = vmatprep.subr.mxu0 0.0
        %1611 = vmatpush1.msra.mxu0 0.0
        %1612 = vmatprep.subr.mxu0 0.0
        %1613 = vmatpush1.msra.mxu0 0.0
        %1614 = vmatprep.mubr.f32.mxu0 0.0
        %1615 = vmatmul.mubr.f32.gmra.mrb[0].mxu0 %v1156
        %v1616 = vpop.f32.mrb[0].mxu0
        %v1617 = vadd.f32 %v1542, %v1616
        %v1618 = vpop.f32.mrb[0].mxu0
        %1619 = vmatprep.mubr.f32.mxu0 0.0
        %1620 = vmatmul.mubr.f32.gmra.mrb[0].mxu0 %v1159
        %v1621 = vpop.f32.mrb[0].mxu0
        %v1622 = vadd.f32 %v1547, %v1621
        %v1623 = vpop.f32.mrb[0].mxu0
        %1624 = vdwg.mxu0
        %v1625 = vmax.f32 %v1465, 0.0
        %v1626 = vmax.f32 %v1467, 0.0
        %v1627 = vmax.f32 %v1617, 0.0
        %v1628 = vmax.f32 %v1471, 0.0
        %v1629 = vmax.f32 %v1473, 0.0
        %v1630 = vmax.f32 %v1622, 0.0
        %v1631 = vld [vmem:[#allocation8] sm:$0xff]
        %v1632 = vld [vmem:[#allocation8 + $0x8] sm:$0xff]
        %v1633 = vld [vmem:[#allocation8 + $0x10] sm:$0xff]
        %v1634 = vld [vmem:[#allocation8 + $0x18] sm:$0xff]
        %v1635 = vld [vmem:[#allocation8 + $0x20] sm:$0xff]
        %v1636 = vld [vmem:[#allocation8 + $0x28] sm:$0xff]
        %v1637 = vld [vmem:[#allocation8 + $0x30] sm:$0xff]
        %v1638 = vld [vmem:[#allocation8 + $0x38] sm:$0xff]
        %v1639 = vld [vmem:[#allocation8 + $0x40] sm:$0xff]
        %v1640 = vld [vmem:[#allocation8 + $0x48] sm:$0xff]
        %v1641 = vld [vmem:[#allocation8 + $0x50] sm:$0xff]
        %v1642 = vld [vmem:[#allocation8 + $0x58] sm:$0xff]
        %v1643 = vld [vmem:[#allocation8 + $0x60] sm:$0xff]
        %v1644 = vld [vmem:[#allocation8 + $0x68] sm:$0xff]
        %v1645 = vld [vmem:[#allocation8 + $0x70] sm:$0xff]
        %v1646 = vld [vmem:[#allocation8 + $0x78] sm:$0xff]
        %v1647 = vld [vmem:[#allocation8 + $0x80] sm:$0xff]
        %v1648 = vld [vmem:[#allocation8 + $0x88] sm:$0xff]
        %v1649 = vld [vmem:[#allocation8 + $0x90] sm:$0xff]
        %v1650 = vld [vmem:[#allocation8 + $0x98] sm:$0xff]
        %v1651 = vld [vmem:[#allocation8 + $0xa0] sm:$0xff]
        %v1652 = vld [vmem:[#allocation8 + $0xa8] sm:$0xff]
        %v1653 = vld [vmem:[#allocation8 + $0xb0] sm:$0xff]
        %v1654 = vld [vmem:[#allocation8 + $0xb8] sm:$0xff]
        %v1655 = vld [vmem:[#allocation8 + $0xc0] sm:$0xff]
        %v1656 = vld [vmem:[#allocation8 + $0xc8] sm:$0xff]
        %v1657 = vld [vmem:[#allocation8 + $0xd0] sm:$0xff]
        %v1658 = vld [vmem:[#allocation8 + $0xd8] sm:$0xff]
        %v1659 = vld [vmem:[#allocation8 + $0xe0] sm:$0xff]
        %v1660 = vld [vmem:[#allocation8 + $0xe8] sm:$0xff]
        %v1661 = vld [vmem:[#allocation8 + $0xf0] sm:$0xff]
        %v1662 = vld [vmem:[#allocation8 + $0xf8] sm:$0xff]
        %v1663 = vld [vmem:[#allocation8 + $0x100] sm:$0xff]
        %v1664 = vld [vmem:[#allocation8 + $0x108] sm:$0xff]
        %v1665 = vld [vmem:[#allocation8 + $0x110] sm:$0xff]
        %v1666 = vld [vmem:[#allocation8 + $0x118] sm:$0xff]
        %v1667 = vld [vmem:[#allocation8 + $0x120] sm:$0xff]
        %v1668 = vld [vmem:[#allocation8 + $0x128] sm:$0xff]
        %v1669 = vld [vmem:[#allocation8 + $0x130] sm:$0xff]
        %v1670 = vld [vmem:[#allocation8 + $0x138] sm:$0xff]
        %v1671 = vld [vmem:[#allocation8 + $0x140] sm:$0xff]
        %v1672 = vld [vmem:[#allocation8 + $0x148] sm:$0xff]
        %v1673 = vld [vmem:[#allocation8 + $0x150] sm:$0xff]
        %v1674 = vld [vmem:[#allocation8 + $0x158] sm:$0xff]
        %v1675 = vld [vmem:[#allocation8 + $0x160] sm:$0xff]
        %v1676 = vld [vmem:[#allocation8 + $0x168] sm:$0xff]
        %v1677 = vld [vmem:[#allocation8 + $0x170] sm:$0xff]
        %v1678 = vld [vmem:[#allocation8 + $0x178] sm:$0xff]
        %v1679 = vld [vmem:[#allocation8 + $0x180] sm:$0xff]
        %v1680 = vld [vmem:[#allocation8 + $0x188] sm:$0xff]
        %v1681 = vld [vmem:[#allocation8 + $0x190] sm:$0xff]
        %v1682 = vld [vmem:[#allocation8 + $0x198] sm:$0xff]
        %v1683 = vld [vmem:[#allocation8 + $0x1a0] sm:$0xff]
        %v1684 = vld [vmem:[#allocation8 + $0x1a8] sm:$0xff]
        %v1685 = vld [vmem:[#allocation8 + $0x1b0] sm:$0xff]
        %v1686 = vld [vmem:[#allocation8 + $0x1b8] sm:$0xff]
        %v1687 = vld [vmem:[#allocation8 + $0x1c0] sm:$0xff]
        %v1688 = vld [vmem:[#allocation8 + $0x1c8] sm:$0xff]
        %v1689 = vld [vmem:[#allocation8 + $0x1d0] sm:$0xff]
        %v1690 = vld [vmem:[#allocation8 + $0x1d8] sm:$0xff]
        %v1691 = vld [vmem:[#allocation8 + $0x1e0] sm:$0xff]
        %v1692 = vld [vmem:[#allocation8 + $0x1e8] sm:$0xff]
        %v1693 = vld [vmem:[#allocation8 + $0x1f0] sm:$0xff]
        %v1694 = vld [vmem:[#allocation8 + $0x1f8] sm:$0xff]
        %v1695 = vld [vmem:[#allocation8 + $0x200] sm:$0xff]
        %v1696 = vld [vmem:[#allocation8 + $0x208] sm:$0xff]
        %v1697 = vld [vmem:[#allocation8 + $0x210] sm:$0xff]
        %v1698 = vld [vmem:[#allocation8 + $0x218] sm:$0xff]
        %v1699 = vld [vmem:[#allocation8 + $0x220] sm:$0xff]
        %v1700 = vld [vmem:[#allocation8 + $0x228] sm:$0xff]
        %v1701 = vld [vmem:[#allocation8 + $0x230] sm:$0xff]
        %v1702 = vld [vmem:[#allocation8 + $0x238] sm:$0xff]
        %v1703 = vld [vmem:[#allocation8 + $0x240] sm:$0xff]
        %v1704 = vld [vmem:[#allocation8 + $0x248] sm:$0xff]
        %v1705 = vld [vmem:[#allocation8 + $0x250] sm:$0xff]
        %v1706 = vld [vmem:[#allocation8 + $0x258] sm:$0xff]
        %v1707 = vld [vmem:[#allocation8 + $0x260] sm:$0xff]
        %v1708 = vld [vmem:[#allocation8 + $0x268] sm:$0xff]
        %v1709 = vld [vmem:[#allocation8 + $0x270] sm:$0xff]
        %v1710 = vld [vmem:[#allocation8 + $0x278] sm:$0xff]
        %v1711 = vld [vmem:[#allocation8 + $0x280] sm:$0xff]
        %v1712 = vld [vmem:[#allocation8 + $0x288] sm:$0xff]
        %v1713 = vld [vmem:[#allocation8 + $0x290] sm:$0xff]
        %v1714 = vld [vmem:[#allocation8 + $0x298] sm:$0xff]
        %v1715 = vld [vmem:[#allocation8 + $0x2a0] sm:$0xff]
        %v1716 = vld [vmem:[#allocation8 + $0x2a8] sm:$0xff]
        %v1717 = vld [vmem:[#allocation8 + $0x2b0] sm:$0xff]
        %v1718 = vld [vmem:[#allocation8 + $0x2b8] sm:$0xff]
        %v1719 = vld [vmem:[#allocation8 + $0x2c0] sm:$0xff]
        %v1720 = vld [vmem:[#allocation8 + $0x2c8] sm:$0xff]
        %v1721 = vld [vmem:[#allocation8 + $0x2d0] sm:$0xff]
        %v1722 = vld [vmem:[#allocation8 + $0x2d8] sm:$0xff]
        %v1723 = vld [vmem:[#allocation8 + $0x2e0] sm:$0xff]
        %v1724 = vld [vmem:[#allocation8 + $0x2e8] sm:$0xff]
        %v1725 = vld [vmem:[#allocation8 + $0x2f0] sm:$0xff]
        %v1726 = vld [vmem:[#allocation8 + $0x2f8] sm:$0xff]
        %v1727 = vld [vmem:[#allocation8 + $0x300] sm:$0xff]
        %v1728 = vld [vmem:[#allocation8 + $0x308] sm:$0xff]
        %v1729 = vld [vmem:[#allocation8 + $0x310] sm:$0xff]
        %v1730 = vld [vmem:[#allocation8 + $0x318] sm:$0xff]
        %v1731 = vld [vmem:[#allocation8 + $0x320] sm:$0xff]
        %v1732 = vld [vmem:[#allocation8 + $0x328] sm:$0xff]
        %v1733 = vld [vmem:[#allocation8 + $0x330] sm:$0xff]
        %v1734 = vld [vmem:[#allocation8 + $0x338] sm:$0xff]
        %v1735 = vld [vmem:[#allocation8 + $0x340] sm:$0xff]
        %v1736 = vld [vmem:[#allocation8 + $0x348] sm:$0xff]
        %v1737 = vld [vmem:[#allocation8 + $0x350] sm:$0xff]
        %v1738 = vld [vmem:[#allocation8 + $0x358] sm:$0xff]
        %v1739 = vld [vmem:[#allocation8 + $0x360] sm:$0xff]
        %v1740 = vld [vmem:[#allocation8 + $0x368] sm:$0xff]
        %v1741 = vld [vmem:[#allocation8 + $0x370] sm:$0xff]
        %v1742 = vld [vmem:[#allocation8 + $0x378] sm:$0xff]
        %v1743 = vld [vmem:[#allocation8 + $0x380] sm:$0xff]
        %v1744 = vld [vmem:[#allocation8 + $0x388] sm:$0xff]
        %v1745 = vld [vmem:[#allocation8 + $0x390] sm:$0xff]
        %v1746 = vld [vmem:[#allocation8 + $0x398] sm:$0xff]
        %v1747 = vld [vmem:[#allocation8 + $0x3a0] sm:$0xff]
        %v1748 = vld [vmem:[#allocation8 + $0x3a8] sm:$0xff]
        %v1749 = vld [vmem:[#allocation8 + $0x3b0] sm:$0xff]
        %v1750 = vld [vmem:[#allocation8 + $0x3b8] sm:$0xff]
        %v1751 = vld [vmem:[#allocation8 + $0x3c0] sm:$0xff]
        %v1752 = vld [vmem:[#allocation8 + $0x3c8] sm:$0xff]
        %v1753 = vld [vmem:[#allocation8 + $0x3d0] sm:$0xff]
        %v1754 = vld [vmem:[#allocation8 + $0x3d8] sm:$0xff]
        %v1755 = vld [vmem:[#allocation8 + $0x3e0] sm:$0xff]
        %v1756 = vld [vmem:[#allocation8 + $0x3e8] sm:$0xff]
        %v1757 = vld [vmem:[#allocation8 + $0x3f0] sm:$0xff]
        %v1758 = vld [vmem:[#allocation8 + $0x3f8] sm:$0xff]
        %v1759 = vld [vmem:[#allocation8 + $0x400] sm:$0xff]
        %v1760 = vld [vmem:[#allocation8 + $0x408] sm:$0xff]
        %v1761 = vld [vmem:[#allocation8 + $0x410] sm:$0xff]
        %v1762 = vld [vmem:[#allocation8 + $0x418] sm:$0xff]
        %v1763 = vld [vmem:[#allocation8 + $0x420] sm:$0xff]
        %v1764 = vld [vmem:[#allocation8 + $0x428] sm:$0xff]
        %v1765 = vld [vmem:[#allocation8 + $0x430] sm:$0xff]
        %v1766 = vld [vmem:[#allocation8 + $0x438] sm:$0xff]
        %v1767 = vld [vmem:[#allocation8 + $0x440] sm:$0xff]
        %v1768 = vld [vmem:[#allocation8 + $0x448] sm:$0xff]
        %v1769 = vld [vmem:[#allocation8 + $0x450] sm:$0xff]
        %v1770 = vld [vmem:[#allocation8 + $0x458] sm:$0xff]
        %v1771 = vld [vmem:[#allocation8 + $0x460] sm:$0xff]
        %v1772 = vld [vmem:[#allocation8 + $0x468] sm:$0xff]
        %v1773 = vld [vmem:[#allocation8 + $0x470] sm:$0xff]
        %v1774 = vld [vmem:[#allocation8 + $0x478] sm:$0xff]
        %v1775 = vld [vmem:[#allocation8 + $0x480] sm:$0xff]
        %v1776 = vld [vmem:[#allocation8 + $0x488] sm:$0xff]
        %v1777 = vld [vmem:[#allocation8 + $0x490] sm:$0xff]
        %v1778 = vld [vmem:[#allocation8 + $0x498] sm:$0xff]
        %v1779 = vld [vmem:[#allocation8 + $0x4a0] sm:$0xff]
        %v1780 = vld [vmem:[#allocation8 + $0x4a8] sm:$0xff]
        %v1781 = vld [vmem:[#allocation8 + $0x4b0] sm:$0xff]
        %v1782 = vld [vmem:[#allocation8 + $0x4b8] sm:$0xff]
        %v1783 = vld [vmem:[#allocation8 + $0x4c0] sm:$0xff]
        %v1784 = vld [vmem:[#allocation8 + $0x4c8] sm:$0xff]
        %v1785 = vld [vmem:[#allocation8 + $0x4d0] sm:$0xff]
        %v1786 = vld [vmem:[#allocation8 + $0x4d8] sm:$0xff]
        %v1787 = vld [vmem:[#allocation8 + $0x4e0] sm:$0xff]
        %v1788 = vld [vmem:[#allocation8 + $0x4e8] sm:$0xff]
        %v1789 = vld [vmem:[#allocation8 + $0x4f0] sm:$0xff]
        %v1790 = vld [vmem:[#allocation8 + $0x4f8] sm:$0xff]
        %v1791 = vld [vmem:[#allocation8 + $0x500] sm:$0xff]
        %v1792 = vld [vmem:[#allocation8 + $0x508] sm:$0xff]
        %v1793 = vld [vmem:[#allocation8 + $0x510] sm:$0xff]
        %v1794 = vld [vmem:[#allocation8 + $0x518] sm:$0xff]
        %v1795 = vld [vmem:[#allocation8 + $0x520] sm:$0xff]
        %v1796 = vld [vmem:[#allocation8 + $0x528] sm:$0xff]
        %v1797 = vld [vmem:[#allocation8 + $0x530] sm:$0xff]
        %v1798 = vld [vmem:[#allocation8 + $0x538] sm:$0xff]
        %v1799 = vld [vmem:[#allocation8 + $0x540] sm:$0xff]
        %v1800 = vld [vmem:[#allocation8 + $0x548] sm:$0xff]
        %v1801 = vld [vmem:[#allocation8 + $0x550] sm:$0xff]
        %v1802 = vld [vmem:[#allocation8 + $0x558] sm:$0xff]
        %v1803 = vld [vmem:[#allocation8 + $0x560] sm:$0xff]
        %v1804 = vld [vmem:[#allocation8 + $0x568] sm:$0xff]
        %v1805 = vld [vmem:[#allocation8 + $0x570] sm:$0xff]
        %v1806 = vld [vmem:[#allocation8 + $0x578] sm:$0xff]
        %v1807 = vld [vmem:[#allocation8 + $0x580] sm:$0xff]
        %v1808 = vld [vmem:[#allocation8 + $0x588] sm:$0xff]
        %v1809 = vld [vmem:[#allocation8 + $0x590] sm:$0xff]
        %v1810 = vld [vmem:[#allocation8 + $0x598] sm:$0xff]
        %v1811 = vld [vmem:[#allocation8 + $0x5a0] sm:$0xff]
        %v1812 = vld [vmem:[#allocation8 + $0x5a8] sm:$0xff]
        %v1813 = vld [vmem:[#allocation8 + $0x5b0] sm:$0xff]
        %v1814 = vld [vmem:[#allocation8 + $0x5b8] sm:$0xff]
        %v1815 = vld [vmem:[#allocation8 + $0x5c0] sm:$0xff]
        %v1816 = vld [vmem:[#allocation8 + $0x5c8] sm:$0xff]
        %v1817 = vld [vmem:[#allocation8 + $0x5d0] sm:$0xff]
        %v1818 = vld [vmem:[#allocation8 + $0x5d8] sm:$0xff]
        %v1819 = vld [vmem:[#allocation8 + $0x5e0] sm:$0xff]
        %v1820 = vld [vmem:[#allocation8 + $0x5e8] sm:$0xff]
        %v1821 = vld [vmem:[#allocation8 + $0x5f0] sm:$0xff]
        %v1822 = vld [vmem:[#allocation8 + $0x5f8] sm:$0xff]
        %1823 = vmatprep.subr.mxu0 %v1632
        %1824 = vmatpush1.msra.mxu0 %v1631
        %1825 = vmatprep.subr.mxu0 %v1636
        %1826 = vmatpush1.msra.mxu0 %v1635
        %1827 = vmatprep.subr.mxu0 %v1640
        %1828 = vmatpush1.msra.mxu0 %v1639
        %1829 = vmatprep.subr.mxu0 %v1644
        %1830 = vmatpush1.msra.mxu0 %v1643
        %1831 = vmatprep.subr.mxu0 %v1648
        %1832 = vmatpush1.msra.mxu0 %v1647
        %1833 = vmatprep.subr.mxu0 %v1652
        %1834 = vmatpush1.msra.mxu0 %v1651
        %1835 = vmatprep.subr.mxu0 %v1656
        %1836 = vmatpush1.msra.mxu0 %v1655
        %1837 = vmatprep.subr.mxu0 %v1660
        %1838 = vmatpush1.msra.mxu0 %v1659
        %1839 = vmatprep.subr.mxu0 %v1664
        %1840 = vmatpush1.msra.mxu0 %v1663
        %1841 = vmatprep.subr.mxu0 %v1668
        %1842 = vmatpush1.msra.mxu0 %v1667
        %1843 = vmatprep.subr.mxu0 %v1672
        %1844 = vmatpush1.msra.mxu0 %v1671
        %1845 = vmatprep.subr.mxu0 %v1676
        %1846 = vmatpush1.msra.mxu0 %v1675
        %1847 = vmatprep.subr.mxu0 %v1680
        %1848 = vmatpush1.msra.mxu0 %v1679
        %1849 = vmatprep.subr.mxu0 %v1684
        %1850 = vmatpush1.msra.mxu0 %v1683
        %1851 = vmatprep.subr.mxu0 %v1688
        %1852 = vmatpush1.msra.mxu0 %v1687
        %1853 = vmatprep.subr.mxu0 %v1692
        %1854 = vmatpush1.msra.mxu0 %v1691
        %1855 = vmatprep.subr.mxu0 %v1696
        %1856 = vmatpush1.msra.mxu0 %v1695
        %1857 = vmatprep.subr.mxu0 %v1700
        %1858 = vmatpush1.msra.mxu0 %v1699
        %1859 = vmatprep.subr.mxu0 %v1704
        %1860 = vmatpush1.msra.mxu0 %v1703
        %1861 = vmatprep.subr.mxu0 %v1708
        %1862 = vmatpush1.msra.mxu0 %v1707
        %1863 = vmatprep.subr.mxu0 %v1712
        %1864 = vmatpush1.msra.mxu0 %v1711
        %1865 = vmatprep.subr.mxu0 %v1716
        %1866 = vmatpush1.msra.mxu0 %v1715
        %1867 = vmatprep.subr.mxu0 %v1720
        %1868 = vmatpush1.msra.mxu0 %v1719
        %1869 = vmatprep.subr.mxu0 %v1724
        %1870 = vmatpush1.msra.mxu0 %v1723
        %1871 = vmatprep.subr.mxu0 %v1728
        %1872 = vmatpush1.msra.mxu0 %v1727
        %1873 = vmatprep.subr.mxu0 %v1732
        %1874 = vmatpush1.msra.mxu0 %v1731
        %1875 = vmatprep.subr.mxu0 %v1736
        %1876 = vmatpush1.msra.mxu0 %v1735
        %1877 = vmatprep.subr.mxu0 %v1740
        %1878 = vmatpush1.msra.mxu0 %v1739
        %1879 = vmatprep.subr.mxu0 %v1744
        %1880 = vmatpush1.msra.mxu0 %v1743
        %1881 = vmatprep.subr.mxu0 %v1748
        %1882 = vmatpush1.msra.mxu0 %v1747
        %1883 = vmatprep.subr.mxu0 %v1752
        %1884 = vmatpush1.msra.mxu0 %v1751
        %1885 = vmatprep.subr.mxu0 %v1756
        %1886 = vmatpush1.msra.mxu0 %v1755
        %1887 = vmatprep.mubr.f32.mxu0 %v1626
        %1888 = vmatmul.mubr.f32.gmra.mrb[0].mxu0 %v1625
        %v1889 = vpop.f32.mrb[0].mxu0
        %v1890 = vadd.f32 0.0, %v1889
        %v1891 = vpop.f32.mrb[0].mxu0
        %v1892 = vadd.f32 0.0, %v1891
        %1893 = vmatprep.mubr.f32.mxu0 %v1629
        %1894 = vmatmul.mubr.f32.gmra.mrb[0].mxu0 %v1628
        %v1895 = vpop.f32.mrb[0].mxu0
        %v1896 = vadd.f32 0.0, %v1895
        %v1897 = vpop.f32.mrb[0].mxu0
        %v1898 = vadd.f32 0.0, %v1897
        %1899 = vdwg.mxu0
        %1900 = vmatprep.subr.mxu0 %v1760
        %1901 = vmatpush1.msra.mxu0 %v1759
        %1902 = vmatprep.subr.mxu0 %v1764
        %1903 = vmatpush1.msra.mxu0 %v1763
        %1904 = vmatprep.subr.mxu0 %v1768
        %1905 = vmatpush1.msra.mxu0 %v1767
        %1906 = vmatprep.subr.mxu0 %v1772
        %1907 = vmatpush1.msra.mxu0 %v1771
        %1908 = vmatprep.subr.mxu0 %v1776
        %1909 = vmatpush1.msra.mxu0 %v1775
        %1910 = vmatprep.subr.mxu0 %v1780
        %1911 = vmatpush1.msra.mxu0 %v1779
        %1912 = vmatprep.subr.mxu0 %v1784
        %1913 = vmatpush1.msra.mxu0 %v1783
        %1914 = vmatprep.subr.mxu0 %v1788
        %1915 = vmatpush1.msra.mxu0 %v1787
        %1916 = vmatprep.subr.mxu0 %v1792
        %1917 = vmatpush1.msra.mxu0 %v1791
        %1918 = vmatprep.subr.mxu0 %v1796
        %1919 = vmatpush1.msra.mxu0 %v1795
        %1920 = vmatprep.subr.mxu0 %v1800
        %1921 = vmatpush1.msra.mxu0 %v1799
        %1922 = vmatprep.subr.mxu0 %v1804
        %1923 = vmatpush1.msra.mxu0 %v1803
        %1924 = vmatprep.subr.mxu0 %v1808
        %1925 = vmatpush1.msra.mxu0 %v1807
        %1926 = vmatprep.subr.mxu0 %v1812
        %1927 = vmatpush1.msra.mxu0 %v1811
        %1928 = vmatprep.subr.mxu0 %v1816
        %1929 = vmatpush1.msra.mxu0 %v1815
        %1930 = vmatprep.subr.mxu0 %v1820
        %1931 = vmatpush1.msra.mxu0 %v1819
        %1932 = vmatprep.subr.mxu0 0.0
        %1933 = vmatpush1.msra.mxu0 0.0
        %1934 = vmatprep.subr.mxu0 0.0
        %1935 = vmatpush1.msra.mxu0 0.0
        %1936 = vmatprep.subr.mxu0 0.0
        %1937 = vmatpush1.msra.mxu0 0.0
        %1938 = vmatprep.subr.mxu0 0.0
        %1939 = vmatpush1.msra.mxu0 0.0
        %1940 = vmatprep.subr.mxu0 0.0
        %1941 = vmatpush1.msra.mxu0 0.0
        %1942 = vmatprep.subr.mxu0 0.0
        %1943 = vmatpush1.msra.mxu0 0.0
        %1944 = vmatprep.subr.mxu0 0.0
        %1945 = vmatpush1.msra.mxu0 0.0
        %1946 = vmatprep.subr.mxu0 0.0
        %1947 = vmatpush1.msra.mxu0 0.0
        %1948 = vmatprep.subr.mxu0 0.0
        %1949 = vmatpush1.msra.mxu0 0.0
        %1950 = vmatprep.subr.mxu0 0.0
        %1951 = vmatpush1.msra.mxu0 0.0
        %1952 = vmatprep.subr.mxu0 0.0
        %1953 = vmatpush1.msra.mxu0 0.0
        %1954 = vmatprep.subr.mxu0 0.0
        %1955 = vmatpush1.msra.mxu0 0.0
        %1956 = vmatprep.subr.mxu0 0.0
        %1957 = vmatpush1.msra.mxu0 0.0
        %1958 = vmatprep.subr.mxu0 0.0
        %1959 = vmatpush1.msra.mxu0 0.0
        %1960 = vmatprep.subr.mxu0 0.0
        %1961 = vmatpush1.msra.mxu0 0.0
        %1962 = vmatprep.subr.mxu0 0.0
        %1963 = vmatpush1.msra.mxu0 0.0
        %1964 = vmatprep.mubr.f32.mxu0 0.0
        %1965 = vmatmul.mubr.f32.gmra.mrb[0].mxu0 %v1627
        %v1966 = vpop.f32.mrb[0].mxu0
        %v1967 = vadd.f32 %v1890, %v1966
        %v1968 = vpop.f32.mrb[0].mxu0
        %v1969 = vadd.f32 %v1892, %v1968
        %1970 = vmatprep.mubr.f32.mxu0 0.0
        %1971 = vmatmul.mubr.f32.gmra.mrb[0].mxu0 %v1630
        %v1972 = vpop.f32.mrb[0].mxu0
        %v1973 = vadd.f32 %v1896, %v1972
        %v1974 = vpop.f32.mrb[0].mxu0
        %v1975 = vadd.f32 %v1898, %v1974
        %1976 = vdwg.mxu0
        %1977 = vmatprep.subr.mxu0 %v1634
        %1978 = vmatpush1.msra.mxu0 %v1633
        %1979 = vmatprep.subr.mxu0 %v1638
        %1980 = vmatpush1.msra.mxu0 %v1637
        %1981 = vmatprep.subr.mxu0 %v1642
        %1982 = vmatpush1.msra.mxu0 %v1641
        %1983 = vmatprep.subr.mxu0 %v1646
        %1984 = vmatpush1.msra.mxu0 %v1645
        %1985 = vmatprep.subr.mxu0 %v1650
        %1986 = vmatpush1.msra.mxu0 %v1649
        %1987 = vmatprep.subr.mxu0 %v1654
        %1988 = vmatpush1.msra.mxu0 %v1653
        %1989 = vmatprep.subr.mxu0 %v1658
        %1990 = vmatpush1.msra.mxu0 %v1657
        %1991 = vmatprep.subr.mxu0 %v1662
        %1992 = vmatpush1.msra.mxu0 %v1661
        %1993 = vmatprep.subr.mxu0 %v1666
        %1994 = vmatpush1.msra.mxu0 %v1665
        %1995 = vmatprep.subr.mxu0 %v1670
        %1996 = vmatpush1.msra.mxu0 %v1669
        %1997 = vmatprep.subr.mxu0 %v1674
        %1998 = vmatpush1.msra.mxu0 %v1673
        %1999 = vmatprep.subr.mxu0 %v1678
        %2000 = vmatpush1.msra.mxu0 %v1677
        %2001 = vmatprep.subr.mxu0 %v1682
        %2002 = vmatpush1.msra.mxu0 %v1681
        %2003 = vmatprep.subr.mxu0 %v1686
        %2004 = vmatpush1.msra.mxu0 %v1685
        %2005 = vmatprep.subr.mxu0 %v1690
        %2006 = vmatpush1.msra.mxu0 %v1689
        %2007 = vmatprep.subr.mxu0 %v1694
        %2008 = vmatpush1.msra.mxu0 %v1693
        %2009 = vmatprep.subr.mxu0 %v1698
        %2010 = vmatpush1.msra.mxu0 %v1697
        %2011 = vmatprep.subr.mxu0 %v1702
        %2012 = vmatpush1.msra.mxu0 %v1701
        %2013 = vmatprep.subr.mxu0 %v1706
        %2014 = vmatpush1.msra.mxu0 %v1705
        %2015 = vmatprep.subr.mxu0 %v1710
        %2016 = vmatpush1.msra.mxu0 %v1709
        %2017 = vmatprep.subr.mxu0 %v1714
        %2018 = vmatpush1.msra.mxu0 %v1713
        %2019 = vmatprep.subr.mxu0 %v1718
        %2020 = vmatpush1.msra.mxu0 %v1717
        %2021 = vmatprep.subr.mxu0 %v1722
        %2022 = vmatpush1.msra.mxu0 %v1721
        %2023 = vmatprep.subr.mxu0 %v1726
        %2024 = vmatpush1.msra.mxu0 %v1725
        %2025 = vmatprep.subr.mxu0 %v1730
        %2026 = vmatpush1.msra.mxu0 %v1729
        %2027 = vmatprep.subr.mxu0 %v1734
        %2028 = vmatpush1.msra.mxu0 %v1733
        %2029 = vmatprep.subr.mxu0 %v1738
        %2030 = vmatpush1.msra.mxu0 %v1737
        %2031 = vmatprep.subr.mxu0 %v1742
        %2032 = vmatpush1.msra.mxu0 %v1741
        %2033 = vmatprep.subr.mxu0 %v1746
        %2034 = vmatpush1.msra.mxu0 %v1745
        %2035 = vmatprep.subr.mxu0 %v1750
        %2036 = vmatpush1.msra.mxu0 %v1749
        %2037 = vmatprep.subr.mxu0 %v1754
        %2038 = vmatpush1.msra.mxu0 %v1753
        %2039 = vmatprep.subr.mxu0 %v1758
        %2040 = vmatpush1.msra.mxu0 %v1757
        %2041 = vmatprep.mubr.f32.mxu0 %v1626
        %2042 = vmatmul.mubr.f32.gmra.mrb[0].mxu0 %v1625
        %v2043 = vpop.f32.mrb[0].mxu0
        %v2044 = vadd.f32 0.0, %v2043
        %v2045 = vpop.f32.mrb[0].mxu0
        %v2046 = vadd.f32 0.0, %v2045
        %2047 = vmatprep.mubr.f32.mxu0 %v1629
        %2048 = vmatmul.mubr.f32.gmra.mrb[0].mxu0 %v1628
        %v2049 = vpop.f32.mrb[0].mxu0
        %v2050 = vadd.f32 0.0, %v2049
        %v2051 = vpop.f32.mrb[0].mxu0
        %v2052 = vadd.f32 0.0, %v2051
        %2053 = vdwg.mxu0
        %2054 = vmatprep.subr.mxu0 %v1762
        %2055 = vmatpush1.msra.mxu0 %v1761
        %2056 = vmatprep.subr.mxu0 %v1766
        %2057 = vmatpush1.msra.mxu0 %v1765
        %2058 = vmatprep.subr.mxu0 %v1770
        %2059 = vmatpush1.msra.mxu0 %v1769
        %2060 = vmatprep.subr.mxu0 %v1774
        %2061 = vmatpush1.msra.mxu0 %v1773
        %2062 = vmatprep.subr.mxu0 %v1778
        %2063 = vmatpush1.msra.mxu0 %v1777
        %2064 = vmatprep.subr.mxu0 %v1782
        %2065 = vmatpush1.msra.mxu0 %v1781
        %2066 = vmatprep.subr.mxu0 %v1786
        %2067 = vmatpush1.msra.mxu0 %v1785
        %2068 = vmatprep.subr.mxu0 %v1790
        %2069 = vmatpush1.msra.mxu0 %v1789
        %2070 = vmatprep.subr.mxu0 %v1794
        %2071 = vmatpush1.msra.mxu0 %v1793
        %2072 = vmatprep.subr.mxu0 %v1798
        %2073 = vmatpush1.msra.mxu0 %v1797
        %2074 = vmatprep.subr.mxu0 %v1802
        %2075 = vmatpush1.msra.mxu0 %v1801
        %2076 = vmatprep.subr.mxu0 %v1806
        %2077 = vmatpush1.msra.mxu0 %v1805
        %2078 = vmatprep.subr.mxu0 %v1810
        %2079 = vmatpush1.msra.mxu0 %v1809
        %2080 = vmatprep.subr.mxu0 %v1814
        %2081 = vmatpush1.msra.mxu0 %v1813
        %2082 = vmatprep.subr.mxu0 %v1818
        %2083 = vmatpush1.msra.mxu0 %v1817
        %2084 = vmatprep.subr.mxu0 %v1822
        %2085 = vmatpush1.msra.mxu0 %v1821
        %2086 = vmatprep.subr.mxu0 0.0
        %2087 = vmatpush1.msra.mxu0 0.0
        %2088 = vmatprep.subr.mxu0 0.0
        %2089 = vmatpush1.msra.mxu0 0.0
        %2090 = vmatprep.subr.mxu0 0.0
        %2091 = vmatpush1.msra.mxu0 0.0
        %2092 = vmatprep.subr.mxu0 0.0
        %2093 = vmatpush1.msra.mxu0 0.0
        %2094 = vmatprep.subr.mxu0 0.0
        %2095 = vmatpush1.msra.mxu0 0.0
        %2096 = vmatprep.subr.mxu0 0.0
        %2097 = vmatpush1.msra.mxu0 0.0
        %2098 = vmatprep.subr.mxu0 0.0
        %2099 = vmatpush1.msra.mxu0 0.0
        %2100 = vmatprep.subr.mxu0 0.0
        %2101 = vmatpush1.msra.mxu0 0.0
        %2102 = vmatprep.subr.mxu0 0.0
        %2103 = vmatpush1.msra.mxu0 0.0
        %2104 = vmatprep.subr.mxu0 0.0
        %2105 = vmatpush1.msra.mxu0 0.0
        %2106 = vmatprep.subr.mxu0 0.0
        %2107 = vmatpush1.msra.mxu0 0.0
        %2108 = vmatprep.subr.mxu0 0.0
        %2109 = vmatpush1.msra.mxu0 0.0
        %2110 = vmatprep.subr.mxu0 0.0
        %2111 = vmatpush1.msra.mxu0 0.0
        %2112 = vmatprep.subr.mxu0 0.0
        %2113 = vmatpush1.msra.mxu0 0.0
        %2114 = vmatprep.subr.mxu0 0.0
        %2115 = vmatpush1.msra.mxu0 0.0
        %2116 = vmatprep.subr.mxu0 0.0
        %2117 = vmatpush1.msra.mxu0 0.0
        %2118 = vmatprep.mubr.f32.mxu0 0.0
        %2119 = vmatmul.mubr.f32.gmra.mrb[0].mxu0 %v1627
        %v2120 = vpop.f32.mrb[0].mxu0
        %v2121 = vadd.f32 %v2044, %v2120
        %v2122 = vpop.f32.mrb[0].mxu0
        %v2123 = vadd.f32 %v2046, %v2122
        %2124 = vmatprep.mubr.f32.mxu0 0.0
        %2125 = vmatmul.mubr.f32.gmra.mrb[0].mxu0 %v1630
        %v2126 = vpop.f32.mrb[0].mxu0
        %v2127 = vadd.f32 %v2050, %v2126
        %v2128 = vpop.f32.mrb[0].mxu0
        %v2129 = vadd.f32 %v2052, %v2128
        %2130 = vdwg.mxu0
        %v2131 = vld [vmem:[#allocation13] sm:$0x1]
        %v2133 = vlaneseq
        %v2134 = vshrl.u32 %v2133, 7
        %v2135 = vsub.s32 0, %v2134
        %v2136 = vrot.slane %v2131, %v2135
        %v2138 = vadd.f32 %v2123, %v2136
        %v2139 = vadd.f32 %v2129, %v2136
        %v2140 = vmax.f32 %v1967, %v1969
        %v2141 = vmax.f32 %v1973, %v1975
        %v2142 = vmax.f32 %v2140, %v2121
        %v2143 = vmax.f32 %v2141, %v2127
        %2144 = vrot.lane.b32.xlu0 %v2142, 64
        %v2145 = vpop.permute.xlu0 %2144
        %2146 = vrot.lane.b32.xlu0 %v2143, 64
        %v2147 = vpop.permute.xlu0 %2146
        %v2148 = vmax.f32 %v2142, %v2145
        %v2149 = vmax.f32 %v2143, %v2147
        %2150 = vrot.lane.b32.xlu0 %v2148, 32
        %v2151 = vpop.permute.xlu0 %2150
        %2152 = vrot.lane.b32.xlu0 %v2149, 32
        %v2153 = vpop.permute.xlu0 %2152
        %v2154 = vmax.f32 %v2148, %v2151
        %v2155 = vmax.f32 %v2149, %v2153
        %v2156 = vadd.f32 %v2154, %v2136
        %v2157 = vadd.f32 %v2155, %v2136
        %2160 = vrot.lane.b32.xlu0 %v2156, 32
        %v2161 = vpop.permute.xlu0 %2160
        %2162 = vrot.lane.b32.xlu0 %v2157, 32
        %v2163 = vpop.permute.xlu0 %2162
        %vm2166 = vcmask 261120
        %v2167 = vsel %vm2166, %v2138, %v2161
        %v2168 = vsel %vm2166, %v2139, %v2163
        %vm2169 = vcmask 523264
        %v2170 = vsel %vm2169, %v2167, 0.0
        %v2171 = vsel %vm2169, %v2168, 0.0
        %2172 = vst [vmem:[%s378] sm:$0xff] %v2170
        %2173 = vst [vmem:[%s378 + $0x8] sm:$0xff] %v2171
        %s2174 = sand.u32 %s187, 1
        %s2175 = scalar_lea.sflag [#allocation4], %s2174
        %s2176 = sand.u32 %s187, 1
        %s2177 = smul.addr %s2176, 16
        %s2178 = scalar_lea.vmem [#allocation14], %s2177
        // Predicated region
        $region77: #{tpu_custom_call.1} parent=47 // pred_check
          %p2179 = pneg %p197
        $region78: #{tpu_custom_call.1} parent=47 // pred_check_branch
          %2181 = sbr.rel (%p2179) target = $region80
        $region79: #{tpu_custom_call.1} parent=47 // pred_region
          %s2182 = smul.u32 2, %s27
          %s2184 = ssub.s32 256, 256
          %2185 = vsyncadd %s2175, %s2184
          %s2186 = smul.addr %s2182, 128
          %s2187 = scalar_lea.hbm %s7, %s2186
          %s2188 = sshll.u32 %s2178, 4
          %s2189 = int_to_ptr.vmem [resolvable:$true] %s2188
          %2194 = dma.vmem_to_hbm [thread:$0]  %s2189, 256, %s2187, %s2175, 128, 128, 8
        $region80: #{tpu_custom_call.1} parent=47 // pred_fallthru
          _
      $region48: #{tpu_custom_call.1} parent=5 // pred_fallthru
        _
      %p2195 = scmp.le.s32.totalorder 2, %s22
      // Predicated region
      $region81: #{tpu_custom_call.1} parent=5 // pred_check
        %p2196 = pneg %p2195
      $region82: #{tpu_custom_call.1} parent=5 // pred_check_branch
        %2198 = sbr.rel (%p2196) target = $region84
      $region83: #{tpu_custom_call.1} parent=5 // pred_region
        %s2199 = ssub.s32 %s22, 2
        // Predicated region
        $region85: #{tpu_custom_call.1} parent=83 // pred_check
          %p2200 = pneg %p203
        $region86: #{tpu_custom_call.1} parent=83 // pred_check_branch
          %2202 = sbr.rel (%p2200) target = $region88
        $region87: #{tpu_custom_call.1} parent=83 // pred_region
          %s2203 = sand.u32 %s188, 1
          %s2204 = scalar_lea.sflag [#allocation4], %s2203
          %s2205 = sand.u32 %s188, 1
          %s2206 = smul.addr %s2205, 16
          %s2207 = scalar_lea.vmem [#allocation14], %s2206
          %2208 = dma.done %s2204, 256
        $region88: #{tpu_custom_call.1} parent=83 // pred_fallthru
          _
      $region84: #{tpu_custom_call.1} parent=5 // pred_fallthru
        _
    $region6: #{tpu_custom_call.1} parent=1 // loop_footer
      %s26 = sadd.s32 1, %s22
    $region7: #{tpu_custom_call.1} parent=1 // loop_footer_branch
      %21 = sbr.rel target = $region3
    $region8: #{tpu_custom_call.1} parent=1 // loop_exit
      _
    %2209 = vsyncpa [#allocation3], 1
    %s2210 = scalar_lea.sflag [#allocation3], 1
    %2211 = vsyncpa %s2210, 1
    %2212 = vsyncpa [#allocation6], 1
    %2213 = vsyncpa [#allocation9], 1
    %2214 = vsyncpa [#allocation12], 1
    %2215 = vsyncpa [#allocation4], 1
    %s2216 = scalar_lea.sflag [#allocation4], 1
    %2217 = vsyncpa %s2216, 1

</llo_original>
